<compile_context>
chip_gen: v7x
topology: tpu7x:2x2x1
jax: 0.10.0
libtpu: 0.0.40
codegen_flags: <defaults>
</compile_context>

<pallas_src>
import functools

import jax
import jax.numpy as jnp
from jax.experimental import pallas as pl
from jax.experimental.pallas import tpu as pltpu


def _round_up(a, b):
    return (a + b - 1) // b * b


def _csain_kernel(regflat_ref, x_ref, w_ref, o_ref, *, H, W, eps):
    """Fused 3x3 conv (gamma & beta) + LeakyReLU + InstanceNorm + modulation.

    Per-grid-step refs (grid = (batch, channel_tile)):
      regflat_ref : (1, Cin_pad, L)          conditioning map flattened to H*W
                                             with W+1 zeros on both ends
                                             (L = H*W + 2*W + 2); resident
                                             across the channel-tile axis.
      x_ref       : (1, Ct, H*W)             content features for this tile.
      w_ref       : (9, 2*Ct, Cin_pad)       per-tap conv weights for this
                                             tile; rows [0:Ct] = gamma,
                                             [Ct:2*Ct] = beta.
      o_ref       : (1, Ct, H*W)             output (lane-dense store).
    """
    HW = H * W
    ct = o_ref.shape[1]                                          # channel tile

    rp = regflat_ref[0]                                          # (Cin_pad, L)
    in_dt = rp.dtype

    # Lane masks that zero the wrap-around terms of the flattened conv at the
    # left (j == 0) / right (j == W-1) image borders.  Kept in the input dtype
    # so a bf16 call stays bf16 on the VPU/MXU.
    col_in_row = jax.lax.broadcasted_iota(jnp.int32, (1, HW), 1) % W
    not_left = (col_in_row != 0).astype(in_dt)                   # kw == 0 taps
    not_right = (col_in_row != W - 1).astype(in_dt)              # kw == 2 taps

    # gamma/beta via 9 accumulated MXU matmuls (no im2col buffer):
    #   gb += W_tap(2*Ct, Cin_pad) @ reg_shifted(Cin_pad, HW)
    # Flat offset of tap (kh, kw) inside the padded flat buffer is kh*W + kw.
    # TODO(synk): when W is a multiple of 128 (production 128x128 maps), switch
    # to a (C, H, W) layout where kh taps are sublane shifts and kw taps are
    # +/-1 lane pltpu.roll, removing the unaligned lane slices below.
    gb = jnp.zeros((2 * ct, HW), jnp.float32)
    for kh in range(3):
        for kw in range(3):
            off = kh * W + kw
            tap = rp[:, off:off + HW]                            # (Cin_pad, HW)
            if kw == 0:
                tap = tap * not_left
            elif kw == 2:
                tap = tap * not_right
            gb = gb + jnp.dot(w_ref[kh * 3 + kw], tap,
                              preferred_element_type=jnp.float32)
    gb = jnp.where(gb > 0, gb, 0.2 * gb)                         # LeakyReLU(0.2)
    gamma = gb[:ct]
    beta = gb[ct:]

    # Instance norm over H*W (lane axis), per channel, f32 statistics.
    # sum / sum-of-squares form: the two reductions are independent.
    xf = x_ref[0].astype(jnp.float32)                            # (Ct, HW)
    s = jnp.sum(xf, axis=1, keepdims=True)
    ss = jnp.sum(xf * xf, axis=1, keepdims=True)
    mean = s * (1.0 / HW)
    var = jnp.maximum(ss * (1.0 / HW) - mean * mean, 0.0)
    xn = (xf - mean) * jax.lax.rsqrt(var + eps)

    o_ref[0] = ((1.0 + gamma) * xn + beta).astype(o_ref.dtype)   # lane-dense


@functools.partial(jax.jit, static_argnames=("eps",))
def csain_forward(x_nchw, reg_nchw, w_gamma_oihw, w_beta_oihw, *, eps=1e-5):
    """CSAIN forward.

    Args (PyTorch conventions):
      x_nchw        : (N, C, H, W)      content features, C == out_channels
      reg_nchw      : (N, Cin, H, W)    conditioning map
      w_gamma_oihw  : (Cout, Cin, 3, 3) gamma conv weights
      w_beta_oihw   : (Cout, Cin, 3, 3) beta  conv weights
    Returns:
      (N, Cout, H, W)
    """
    N, C, H, W = x_nchw.shape
    Nr, Cin, Hr, Wr = reg_nchw.shape
    Cout = w_gamma_oihw.shape[0]
    assert (Nr, Hr, Wr) == (N, H, W) and C == Cout

    HW = H * W
    L = HW + 2 * W + 2

    # Pad channel counts so every sublane tile is full / 8-aligned.
    cin_p = _round_up(Cin, 8)
    cout_p8 = _round_up(Cout, 8)
    c_tile = min(cout_p8, 128)             # channel tile per grid step
    cout_p = _round_up(cout_p8, c_tile)
    n_ct = cout_p // c_tile                # >1 at production sizes -> 2nd
                                           # parallel axis feeds both v7x TCs

    # Lane-dense (C, H*W) layout is a plain reshape of NCHW -> no transposes.
    x_flat = jnp.pad(x_nchw, ((0, 0), (0, cout_p - Cout), (0, 0), (0, 0)))
    x_flat = x_flat.reshape(N, cout_p, HW)

    # Flattened "same"-padded conditioning map: one zero row (W) top/bottom
    # plus one extra zero on each end (covers the corner taps).
    reg_flat = jnp.pad(reg_nchw, ((0, 0), (0, cin_p - Cin), (0, 0), (0, 0)))
    reg_flat = jnp.pad(reg_flat.reshape(N, cin_p, HW),
                       ((0, 0), (0, 0), (W + 1, W + 1)))          # (N, cin_p, L)

    # Per-tap weight matrices, rows grouped per channel tile as [gamma; beta]
    # so a single 2*c_tile row-block per grid step holds both.
    def pad_w(w):
        return jnp.pad(w, ((0, cout_p - Cout), (0, cin_p - Cin), (0, 0), (0, 0)))

    wg = jnp.transpose(pad_w(w_gamma_oihw), (2, 3, 0, 1)).reshape(
        9, n_ct, c_tile, cin_p)
    wb = jnp.transpose(pad_w(w_beta_oihw), (2, 3, 0, 1)).reshape(
        9, n_ct, c_tile, cin_p)
    w_all = jnp.concatenate([wg, wb], axis=2).reshape(9, 2 * cout_p, cin_p)

    kernel = functools.partial(_csain_kernel, H=H, W=W, eps=eps)

    out_flat = pl.pallas_call(
        kernel,
        out_shape=jax.ShapeDtypeStruct((N, cout_p, HW), x_nchw.dtype),
        grid_spec=pltpu.PrefetchScalarGridSpec(
            num_scalar_prefetch=0,
            grid=(N, n_ct),
            in_specs=[
                # reg: resident across the channel-tile axis (constant index).
                pl.BlockSpec((1, cin_p, L), lambda n, c: (n, 0, 0)),
                pl.BlockSpec((1, c_tile, HW), lambda n, c: (n, c, 0)),
                pl.BlockSpec((9, 2 * c_tile, cin_p), lambda n, c: (0, c, 0)),
            ],
            out_specs=pl.BlockSpec((1, c_tile, HW), lambda n, c: (n, c, 0)),
        ),
        compiler_params=pltpu.CompilerParams(
            dimension_semantics=("parallel", "parallel"),
            vmem_limit_bytes=64 * 1024 * 1024),
    )(reg_flat, x_flat, w_all)

    # TODO(synk): for very large H*W, add an H-tile grid axis with a 1-row conv
    # halo and sum/sum-sq accumulators finalized with pl.when on the last step
    # (plus pl.Buffered(3) on the reg input) so the per-step working set stays
    # within v7x's 64 MiB VMEM.
    return out_flat[:, :Cout, :].reshape(N, Cout, H, W)


def _reference_csain(x, reg, wg, wb, eps=1e-5):
    """Pure-JAX reference (NCHW), mirrors the PyTorch module (f32 math)."""
    def conv_lrelu(r, w):
        y = jax.lax.conv_general_dilated(
            r.astype(jnp.float32), w.astype(jnp.float32),
            window_strides=(1, 1), padding=((1, 1), (1, 1)),
            dimension_numbers=("NCHW", "OIHW", "NCHW"))
        return jnp.where(y > 0, y, 0.2 * y)

    gamma = conv_lrelu(reg, wg)
    beta = conv_lrelu(reg, wb)
    xf = x.astype(jnp.float32)
    mean = jnp.mean(xf, axis=(2, 3), keepdims=True)
    var = jnp.mean((xf - mean) ** 2, axis=(2, 3), keepdims=True)
    xn = (xf - mean) / jnp.sqrt(var + eps)
    return (1.0 + gamma) * xn + beta


if __name__ == "__main__":
    # Small shapes consistent with the module:
    #   reg_matrix channels (in_channels) = 4, gamma/beta channels (out_channels) = 8,
    #   input channels (in_channel) = 8, spatial 16x16, batch 2.
    N, Cin, Cout, H, W = 2, 4, 8, 16, 16

    key = jax.random.PRNGKey(0)
    kx, kr, kg, kb = jax.random.split(key, 4)

    x = jax.random.normal(kx, (N, Cout, H, W), dtype=jnp.float32)
    reg = jax.random.normal(kr, (N, Cin, H, W), dtype=jnp.float32)
    w_gamma = jax.random.normal(kg, (Cout, Cin, 3, 3), dtype=jnp.float32) * 0.1
    w_beta = jax.random.normal(kb, (Cout, Cin, 3, 3), dtype=jnp.float32) * 0.1

    ref = _reference_csain(x, reg, w_gamma, w_beta)

    # f32 path.
    out = jax.block_until_ready(csain_forward(x, reg, w_gamma, w_beta))
    assert out.shape == (N, Cout, H, W)
    assert jnp.allclose(out, ref, atol=2e-4, rtol=2e-4), \
        f"f32 max err {jnp.max(jnp.abs(out - ref))}"

    # bf16 path (operands stay bf16 on the MXU; norm statistics in f32).
    out_bf16 = jax.block_until_ready(
        csain_forward(x.astype(jnp.bfloat16), reg.astype(jnp.bfloat16),
                      w_gamma.astype(jnp.bfloat16), w_beta.astype(jnp.bfloat16)))
    assert jnp.allclose(out_bf16.astype(jnp.float32), ref, atol=0.15, rtol=0.05), \
        f"bf16 max err {jnp.max(jnp.abs(out_bf16.astype(jnp.float32) - ref))}"

    print("KERNEL_OK")
</pallas_src>

<mosaic_0001>
module attributes {stable_mosaic.version = 11 : i64} {
  func.func @_csain_kernel(%arg0: i32, %arg1: i32, %arg2: memref<1x8x290xf32, #tpu.memory_space<vmem>>, %arg3: memref<1x8x256xf32, #tpu.memory_space<vmem>>, %arg4: memref<9x16x8xf32, #tpu.memory_space<vmem>>, %arg5: memref<1x8x256xf32, #tpu.memory_space<vmem>>) attributes {dimension_semantics = [#tpu.dimension_semantics<parallel>, #tpu.dimension_semantics<parallel>], iteration_bounds = array<i64: 2, 1>, scalar_prefetch = 0 : i64, scratch_operands = 0 : i64, tpu.core_type = #tpu.core_type<tc>, window_params = [{transform_indices = @transform_0, window_bounds = array<i64: 1, 8, 290>}, {transform_indices = @transform_1, window_bounds = array<i64: 1, 8, 256>}, {transform_indices = @transform_2, window_bounds = array<i64: 9, 16, 8>}, {transform_indices = @transform_3, window_bounds = array<i64: 1, 8, 256>}]} {
    %c0 = arith.constant 0 : index
    %c0_0 = arith.constant 0 : index
    %c0_1 = arith.constant 0 : index
    %0 = vector.load %arg2[%c0, %c0_0, %c0_1] : memref<1x8x290xf32, #tpu.memory_space<vmem>>, vector<1x8x290xf32>
    %1 = vector.shape_cast %0 : vector<1x8x290xf32> to vector<8x290xf32>
    %2 = tpu.iota {dimensions = array<i32: 1>} : vector<1x256xi32>
    %c16_i32 = arith.constant 16 : i32
    %c0_i32 = arith.constant 0 : i32
    %3 = arith.cmpi eq, %c16_i32, %c0_i32 : i32
    %c1_i32 = arith.constant 1 : i32
    %4 = arith.select %3, %c1_i32, %c16_i32 : i32
    %5 = vector.broadcast %4 : i32 to vector<1x256xi32>
    %6 = arith.remsi %2, %5 : vector<1x256xi32>
    %c0_i32_2 = arith.constant 0 : i32
    %7 = vector.broadcast %c0_i32_2 : i32 to vector<1x256xi32>
    %8 = arith.cmpi ne, %6, %7 : vector<1x256xi32>
    %c0_i32_3 = arith.constant 0 : i32
    %9 = vector.broadcast %c0_i32_3 : i32 to vector<1x256xi32>
    %10 = arith.cmpi slt, %6, %9 : vector<1x256xi32>
    %c0_i32_4 = arith.constant 0 : i32
    %11 = arith.cmpi slt, %4, %c0_i32_4 : i32
    %12 = vector.broadcast %11 : i1 to vector<1x256xi1>
    %13 = vector.broadcast %12 : vector<1x256xi1> to vector<1x256xi1>
    %14 = arith.xori %10, %13 : vector<1x256xi1>
    %15 = arith.andi %14, %8 : vector<1x256xi1>
    %16 = vector.broadcast %4 : i32 to vector<1x256xi32>
    %17 = arith.addi %6, %16 : vector<1x256xi32>
    %18 = arith.select %15, %17, %6 : vector<1x256xi1>, vector<1x256xi32>
    %c0_i32_5 = arith.constant 0 : i32
    %19 = vector.broadcast %c0_i32_5 : i32 to vector<1x256xi32>
    %20 = arith.cmpi ne, %18, %19 : vector<1x256xi32>
    %21 = arith.extui %20 : vector<1x256xi1> to vector<1x256xi32>
    %22 = arith.sitofp %21 : vector<1x256xi32> to vector<1x256xf32>
    %c15_i32 = arith.constant 15 : i32
    %23 = vector.broadcast %c15_i32 : i32 to vector<1x256xi32>
    %24 = arith.cmpi ne, %18, %23 : vector<1x256xi32>
    %25 = arith.extui %24 : vector<1x256xi1> to vector<1x256xi32>
    %26 = arith.sitofp %25 : vector<1x256xi32> to vector<1x256xf32>
    %cst = arith.constant 0.000000e+00 : f32
    %27 = vector.broadcast %cst : f32 to vector<16x256xf32>
    %28 = vector.extract_strided_slice %1 {offsets = [0, 0], sizes = [8, 256], strides = [1, 1]} : vector<8x290xf32> to vector<8x256xf32>
    %29 = vector.broadcast %22 : vector<1x256xf32> to vector<8x256xf32>
    %30 = arith.mulf %28, %29 : vector<8x256xf32>
    %c0_6 = arith.constant 0 : index
    %c0_7 = arith.constant 0 : index
    %c0_8 = arith.constant 0 : index
    %31 = vector.load %arg4[%c0_6, %c0_7, %c0_8] : memref<9x16x8xf32, #tpu.memory_space<vmem>>, vector<1x16x8xf32>
    %32 = vector.shape_cast %31 : vector<1x16x8xf32> to vector<16x8xf32>
    %cst_9 = arith.constant dense<0.000000e+00> : vector<16x256xf32>
    %33 = tpu.matmul %32, %30, %cst_9 {dimension_numbers = #tpu.dot_dimension_numbers<[1], [0], [0], [1], [0, 0, 1, 1], [], []>} : vector<16x8xf32>, vector<8x256xf32>, vector<16x256xf32> -> vector<16x256xf32>
    %34 = arith.addf %27, %33 : vector<16x256xf32>
    %35 = vector.extract_strided_slice %1 {offsets = [0, 1], sizes = [8, 256], strides = [1, 1]} : vector<8x290xf32> to vector<8x256xf32>
    %c1 = arith.constant 1 : index
    %c0_10 = arith.constant 0 : index
    %c0_11 = arith.constant 0 : index
    %36 = vector.load %arg4[%c1, %c0_10, %c0_11] : memref<9x16x8xf32, #tpu.memory_space<vmem>>, vector<1x16x8xf32>
    %37 = vector.shape_cast %36 : vector<1x16x8xf32> to vector<16x8xf32>
    %cst_12 = arith.constant dense<0.000000e+00> : vector<16x256xf32>
    %38 = tpu.matmul %37, %35, %cst_12 {dimension_numbers = #tpu.dot_dimension_numbers<[1], [0], [0], [1], [0, 0, 1, 1], [], []>} : vector<16x8xf32>, vector<8x256xf32>, vector<16x256xf32> -> vector<16x256xf32>
    %39 = arith.addf %34, %38 : vector<16x256xf32>
    %40 = vector.extract_strided_slice %1 {offsets = [0, 2], sizes = [8, 256], strides = [1, 1]} : vector<8x290xf32> to vector<8x256xf32>
    %41 = vector.broadcast %26 : vector<1x256xf32> to vector<8x256xf32>
    %42 = arith.mulf %40, %41 : vector<8x256xf32>
    %c2 = arith.constant 2 : index
    %c0_13 = arith.constant 0 : index
    %c0_14 = arith.constant 0 : index
    %43 = vector.load %arg4[%c2, %c0_13, %c0_14] : memref<9x16x8xf32, #tpu.memory_space<vmem>>, vector<1x16x8xf32>
    %44 = vector.shape_cast %43 : vector<1x16x8xf32> to vector<16x8xf32>
    %cst_15 = arith.constant dense<0.000000e+00> : vector<16x256xf32>
    %45 = tpu.matmul %44, %42, %cst_15 {dimension_numbers = #tpu.dot_dimension_numbers<[1], [0], [0], [1], [0, 0, 1, 1], [], []>} : vector<16x8xf32>, vector<8x256xf32>, vector<16x256xf32> -> vector<16x256xf32>
    %46 = arith.addf %39, %45 : vector<16x256xf32>
    %47 = vector.extract_strided_slice %1 {offsets = [0, 16], sizes = [8, 256], strides = [1, 1]} : vector<8x290xf32> to vector<8x256xf32>
    %48 = vector.broadcast %22 : vector<1x256xf32> to vector<8x256xf32>
    %49 = arith.mulf %47, %48 : vector<8x256xf32>
    %c3 = arith.constant 3 : index
    %c0_16 = arith.constant 0 : index
    %c0_17 = arith.constant 0 : index
    %50 = vector.load %arg4[%c3, %c0_16, %c0_17] : memref<9x16x8xf32, #tpu.memory_space<vmem>>, vector<1x16x8xf32>
    %51 = vector.shape_cast %50 : vector<1x16x8xf32> to vector<16x8xf32>
    %cst_18 = arith.constant dense<0.000000e+00> : vector<16x256xf32>
    %52 = tpu.matmul %51, %49, %cst_18 {dimension_numbers = #tpu.dot_dimension_numbers<[1], [0], [0], [1], [0, 0, 1, 1], [], []>} : vector<16x8xf32>, vector<8x256xf32>, vector<16x256xf32> -> vector<16x256xf32>
    %53 = arith.addf %46, %52 : vector<16x256xf32>
    %54 = vector.extract_strided_slice %1 {offsets = [0, 17], sizes = [8, 256], strides = [1, 1]} : vector<8x290xf32> to vector<8x256xf32>
    %c4 = arith.constant 4 : index
    %c0_19 = arith.constant 0 : index
    %c0_20 = arith.constant 0 : index
    %55 = vector.load %arg4[%c4, %c0_19, %c0_20] : memref<9x16x8xf32, #tpu.memory_space<vmem>>, vector<1x16x8xf32>
    %56 = vector.shape_cast %55 : vector<1x16x8xf32> to vector<16x8xf32>
    %cst_21 = arith.constant dense<0.000000e+00> : vector<16x256xf32>
    %57 = tpu.matmul %56, %54, %cst_21 {dimension_numbers = #tpu.dot_dimension_numbers<[1], [0], [0], [1], [0, 0, 1, 1], [], []>} : vector<16x8xf32>, vector<8x256xf32>, vector<16x256xf32> -> vector<16x256xf32>
    %58 = arith.addf %53, %57 : vector<16x256xf32>
    %59 = vector.extract_strided_slice %1 {offsets = [0, 18], sizes = [8, 256], strides = [1, 1]} : vector<8x290xf32> to vector<8x256xf32>
    %60 = vector.broadcast %26 : vector<1x256xf32> to vector<8x256xf32>
    %61 = arith.mulf %59, %60 : vector<8x256xf32>
    %c5 = arith.constant 5 : index
    %c0_22 = arith.constant 0 : index
    %c0_23 = arith.constant 0 : index
    %62 = vector.load %arg4[%c5, %c0_22, %c0_23] : memref<9x16x8xf32, #tpu.memory_space<vmem>>, vector<1x16x8xf32>
    %63 = vector.shape_cast %62 : vector<1x16x8xf32> to vector<16x8xf32>
    %cst_24 = arith.constant dense<0.000000e+00> : vector<16x256xf32>
    %64 = tpu.matmul %63, %61, %cst_24 {dimension_numbers = #tpu.dot_dimension_numbers<[1], [0], [0], [1], [0, 0, 1, 1], [], []>} : vector<16x8xf32>, vector<8x256xf32>, vector<16x256xf32> -> vector<16x256xf32>
    %65 = arith.addf %58, %64 : vector<16x256xf32>
    %66 = vector.extract_strided_slice %1 {offsets = [0, 32], sizes = [8, 256], strides = [1, 1]} : vector<8x290xf32> to vector<8x256xf32>
    %67 = vector.broadcast %22 : vector<1x256xf32> to vector<8x256xf32>
    %68 = arith.mulf %66, %67 : vector<8x256xf32>
    %c6 = arith.constant 6 : index
    %c0_25 = arith.constant 0 : index
    %c0_26 = arith.constant 0 : index
    %69 = vector.load %arg4[%c6, %c0_25, %c0_26] : memref<9x16x8xf32, #tpu.memory_space<vmem>>, vector<1x16x8xf32>
    %70 = vector.shape_cast %69 : vector<1x16x8xf32> to vector<16x8xf32>
    %cst_27 = arith.constant dense<0.000000e+00> : vector<16x256xf32>
    %71 = tpu.matmul %70, %68, %cst_27 {dimension_numbers = #tpu.dot_dimension_numbers<[1], [0], [0], [1], [0, 0, 1, 1], [], []>} : vector<16x8xf32>, vector<8x256xf32>, vector<16x256xf32> -> vector<16x256xf32>
    %72 = arith.addf %65, %71 : vector<16x256xf32>
    %73 = vector.extract_strided_slice %1 {offsets = [0, 33], sizes = [8, 256], strides = [1, 1]} : vector<8x290xf32> to vector<8x256xf32>
    %c7 = arith.constant 7 : index
    %c0_28 = arith.constant 0 : index
    %c0_29 = arith.constant 0 : index
    %74 = vector.load %arg4[%c7, %c0_28, %c0_29] : memref<9x16x8xf32, #tpu.memory_space<vmem>>, vector<1x16x8xf32>
    %75 = vector.shape_cast %74 : vector<1x16x8xf32> to vector<16x8xf32>
    %cst_30 = arith.constant dense<0.000000e+00> : vector<16x256xf32>
    %76 = tpu.matmul %75, %73, %cst_30 {dimension_numbers = #tpu.dot_dimension_numbers<[1], [0], [0], [1], [0, 0, 1, 1], [], []>} : vector<16x8xf32>, vector<8x256xf32>, vector<16x256xf32> -> vector<16x256xf32>
    %77 = arith.addf %72, %76 : vector<16x256xf32>
    %78 = vector.extract_strided_slice %1 {offsets = [0, 34], sizes = [8, 256], strides = [1, 1]} : vector<8x290xf32> to vector<8x256xf32>
    %79 = vector.broadcast %26 : vector<1x256xf32> to vector<8x256xf32>
    %80 = arith.mulf %78, %79 : vector<8x256xf32>
    %c8 = arith.constant 8 : index
    %c0_31 = arith.constant 0 : index
    %c0_32 = arith.constant 0 : index
    %81 = vector.load %arg4[%c8, %c0_31, %c0_32] : memref<9x16x8xf32, #tpu.memory_space<vmem>>, vector<1x16x8xf32>
    %82 = vector.shape_cast %81 : vector<1x16x8xf32> to vector<16x8xf32>
    %cst_33 = arith.constant dense<0.000000e+00> : vector<16x256xf32>
    %83 = tpu.matmul %82, %80, %cst_33 {dimension_numbers = #tpu.dot_dimension_numbers<[1], [0], [0], [1], [0, 0, 1, 1], [], []>} : vector<16x8xf32>, vector<8x256xf32>, vector<16x256xf32> -> vector<16x256xf32>
    %84 = arith.addf %77, %83 : vector<16x256xf32>
    %cst_34 = arith.constant 0.000000e+00 : f32
    %85 = vector.broadcast %cst_34 : f32 to vector<16x256xf32>
    %86 = arith.cmpf ogt, %84, %85 : vector<16x256xf32>
    %cst_35 = arith.constant 2.000000e-01 : f32
    %87 = vector.broadcast %cst_35 : f32 to vector<16x256xf32>
    %88 = arith.mulf %87, %84 : vector<16x256xf32>
    %89 = arith.select %86, %84, %88 : vector<16x256xi1>, vector<16x256xf32>
    %90 = vector.extract_strided_slice %89 {offsets = [0, 0], sizes = [8, 256], strides = [1, 1]} : vector<16x256xf32> to vector<8x256xf32>
    %91 = vector.extract_strided_slice %89 {offsets = [8, 0], sizes = [8, 256], strides = [1, 1]} : vector<16x256xf32> to vector<8x256xf32>
    %c0_36 = arith.constant 0 : index
    %c0_37 = arith.constant 0 : index
    %c0_38 = arith.constant 0 : index
    %92 = vector.load %arg3[%c0_36, %c0_37, %c0_38] : memref<1x8x256xf32, #tpu.memory_space<vmem>>, vector<1x8x256xf32>
    %93 = vector.shape_cast %92 : vector<1x8x256xf32> to vector<8x256xf32>
    %cst_39 = arith.constant dense<0.000000e+00> : vector<8xf32>
    %94 = vector.multi_reduction <add>, %93, %cst_39 [1] : vector<8x256xf32> to vector<8xf32>
    %95 = vector.shape_cast %94 : vector<8xf32> to vector<8x1xf32>
    %96 = arith.mulf %93, %93 : vector<8x256xf32>
    %cst_40 = arith.constant dense<0.000000e+00> : vector<8xf32>
    %97 = vector.multi_reduction <add>, %96, %cst_40 [1] : vector<8x256xf32> to vector<8xf32>
    %98 = vector.shape_cast %97 : vector<8xf32> to vector<8x1xf32>
    %cst_41 = arith.constant 3.906250e-03 : f32
    %99 = vector.broadcast %cst_41 : f32 to vector<8x1xf32>
    %100 = arith.mulf %95, %99 : vector<8x1xf32>
    %cst_42 = arith.constant 3.906250e-03 : f32
    %101 = vector.broadcast %cst_42 : f32 to vector<8x1xf32>
    %102 = arith.mulf %98, %101 : vector<8x1xf32>
    %103 = arith.mulf %100, %100 : vector<8x1xf32>
    %104 = arith.subf %102, %103 : vector<8x1xf32>
    %cst_43 = arith.constant 0.000000e+00 : f32
    %105 = vector.broadcast %cst_43 : f32 to vector<8x1xf32>
    %106 = arith.maximumf %104, %105 : vector<8x1xf32>
    %107 = vector.broadcast %100 : vector<8x1xf32> to vector<8x256xf32>
    %108 = arith.subf %93, %107 : vector<8x256xf32>
    %cst_44 = arith.constant 9.99999974E-6 : f32
    %109 = vector.broadcast %cst_44 : f32 to vector<8x1xf32>
    %110 = arith.addf %106, %109 : vector<8x1xf32>
    %111 = math.rsqrt %110 : vector<8x1xf32>
    %112 = vector.broadcast %111 : vector<8x1xf32> to vector<8x256xf32>
    %113 = arith.mulf %108, %112 : vector<8x256xf32>
    %cst_45 = arith.constant 1.000000e+00 : f32
    %114 = vector.broadcast %cst_45 : f32 to vector<8x256xf32>
    %115 = arith.addf %114, %90 : vector<8x256xf32>
    %116 = arith.mulf %115, %113 : vector<8x256xf32>
    %117 = arith.addf %116, %91 : vector<8x256xf32>
    %c0_46 = arith.constant 0 : index
    %c0_47 = arith.constant 0 : index
    %c0_48 = arith.constant 0 : index
    %118 = vector.load %arg5[%c0_46, %c0_47, %c0_48] : memref<1x8x256xf32, #tpu.memory_space<vmem>>, vector<1x8x256xf32>
    %119 = vector.shape_cast %118 : vector<1x8x256xf32> to vector<8x256xf32>
    %120 = vector.shape_cast %117 : vector<8x256xf32> to vector<1x8x256xf32>
    tpu.vector_store %arg5[%c0_46, %c0_47, %c0_48], %120 {strides = array<i32>} : memref<1x8x256xf32, #tpu.memory_space<vmem>>, vector<1x8x256xf32>,
    return
  }
  func.func @transform_0(%arg0: i32, %arg1: i32) -> (i32, i32, i32) {
    %c0_i32 = arith.constant 0 : i32
    %c0_i32_0 = arith.constant 0 : i32
    %c0_i32_1 = arith.constant 0 : i32
    return %arg0, %c0_i32, %c0_i32_0 : i32, i32, i32
  }
  func.func @transform_1(%arg0: i32, %arg1: i32) -> (i32, i32, i32) {
    %c0_i32 = arith.constant 0 : i32
    %c0_i32_0 = arith.constant 0 : i32
    return %arg0, %arg1, %c0_i32 : i32, i32, i32
  }
  func.func @transform_2(%arg0: i32, %arg1: i32) -> (i32, i32, i32) {
    %c0_i32 = arith.constant 0 : i32
    %c0_i32_0 = arith.constant 0 : i32
    %c0_i32_1 = arith.constant 0 : i32
    return %c0_i32, %arg1, %c0_i32_0 : i32, i32, i32
  }
  func.func @transform_3(%arg0: i32, %arg1: i32) -> (i32, i32, i32) {
    %c0_i32 = arith.constant 0 : i32
    %c0_i32_0 = arith.constant 0 : i32
    return %arg0, %arg1, %c0_i32 : i32, i32, i32
  }
}

</mosaic_0001>

<llo_original>
// kernel: csain_forward.1
$region0: #{csain_forward.1}
  #allocation0 [shape = 'u32[]', space=smem, size = 0x4, offset = 0x4, fixed_abs, tag = 'smem constant byte address 0x4 - core index']
  #allocation1 [shape = 'u32[144,128]{1,0:T(1,128)}', space=vmem, size = 0x12000, scoped, tag = 'internal scratch']
  %s0 = inlined_call_operand.hbm [shape: f32[2,8,290], index: 0, kind: input, shape index: {}]
  %s1 = inlined_call_operand.hbm [shape: f32[2,8,256], index: 1, kind: input, shape index: {}]
  %s2 = inlined_call_operand.hbm [shape: f32[9,16,8], index: 2, kind: input, shape index: {}]
  %s3 = inlined_call_operand.hbm [shape: f32[2,8,256], index: 3, kind: output, shape index: {}]
  %s4 = sld [smem:[#allocation0]]
  $region57: #{csain_forward.1} parent=0
    _
  %s6 = ssub.s32 1, %s4
  %s7 = scalar_select 0, %s6, %s4
  $region1: #{csain_forward.1} parent=0
    #allocation2 [shape = 'u8[24576]{0}', space=vmem, size = 0x6000, scoped, tag = 'input window, operand 0']
    #allocation3 [shape = 's32[2]{0}', space=sflag, size = 0x8, scoped, tag = 'scoped memory for csain_forward.1']
    #allocation4 [shape = 's32[2]{0}', space=sflag, size = 0x8, scoped, tag = 'scoped memory for csain_forward.1']
    #allocation5 [shape = 'u8[16384]{0}', space=vmem, size = 0x4000, scoped, tag = 'input window, operand 1']
    #allocation6 [shape = 's32[2]{0}', space=sflag, size = 0x8, scoped, tag = 'scoped memory for csain_forward.1']
    #allocation7 [shape = 'u8[73728]{0}', space=vmem, size = 0x12000, scoped, tag = 'input window, operand 2, single buffered']
    #allocation8 [shape = 'u8[16384]{0}', space=vmem, size = 0x4000, scoped, tag = 'output window, operand 0']
    %8 = vsyncpa [#allocation3], 0
    %s9 = scalar_lea.sflag [#allocation3], 1
    %10 = vsyncpa %s9, 0
    %11 = vsyncpa [#allocation6], 0
    %s12 = scalar_lea.sflag [#allocation6], 1
    %13 = vsyncpa %s12, 0
    %14 = vsyncpa [#allocation4], 0
    %s15 = scalar_lea.sflag [#allocation4], 1
    %16 = vsyncpa %s15, 0
    loop: start=0, step=1, limit=4
    $region2: #{csain_forward.1} parent=1 // loop_pre_header
      _
    $region3: #{csain_forward.1} parent=1 // loop_header
      %s18 = sphi 0, %s22
      %p19 = scmp.ge.s32.totalorder %s18, 4
      %s25 = sphi 0, %s37
      %s26 = sphi 0, %s33
      %s27 = sphi 0, %s25
      %s28 = sphi 0, %s26
      %s29 = sphi 0, %s27
      %s30 = sphi 0, %s28
      %s40 = sphi 0, %s42
      %s43 = sphi 0, %s40
      %s44 = sphi 0, %s43
      %s60 = sphi 0, %s44
      %s68 = sphi 0, %s70
      %s71 = sphi 0, %s68
      %s72 = sphi 0, %s71
      %s88 = sphi 0, %s72
      %s94 = sphi 0, %s96
      %s97 = sphi 0, %s94
      %s98 = sphi 0, %s97
      %s114 = sphi 0, %s98
      %s122 = sphi 0, %s124
      %s125 = sphi 0, %s122
      %s126 = sphi 0, %s125
      %s142 = sphi 0, %s126
    $region4: #{csain_forward.1} parent=1 // loop_header_branch
      %21 = sbr.rel (%p19) target = $region8
    $region5: #{csain_forward.1} parent=1 // loop_body
      %s23 = ssub.s32 %s18, 1
      %s24 = ssub.s32 %s18, 2
      %s31 = sadd.s32 1, %s26
      %p32 = scmp.ge.s32.totalorder %s31, 1
      %s33 = scalar_select %p32, 0, %s31
      %s34 = sadd.s32 1, %s25
      %s35 = scalar_select %p32, %s34, %s25
      %p36 = scmp.ge.s32.totalorder %s35, 2
      %s37 = scalar_select %p36, 0, %s35
      %s38 = ssub.s32 %s25, %s37
      %p39 = scmp.eq.s32.totalorder %s38, 0
      %s41 = sadd.s32 %s40, 1
      %s42 = scalar_select %p39, %s40, %s41
      %p45 = pneg %p39
      %p46 = scmp.eq.s32.totalorder %s18, 1
      %p47 = por %p45, %p46
      %p48 = scmp.ne.s32.totalorder %s40, %s43
      %p49 = scmp.eq.s32.totalorder %s18, 0
      %p50 = por %p48, %p49
      %p51 = scmp.ne.s32.totalorder %s40, %s43
      %p52 = scmp.eq.s32.totalorder %s23, 1
      %p53 = por %p51, %p52
      %p54 = scmp.ne.s32.totalorder %s43, %s44
      %p55 = scmp.eq.s32.totalorder %s23, 0
      %p56 = por %p54, %p55
      %p57 = scmp.ne.s32.totalorder %s43, %s44
      %p58 = scmp.eq.s32.totalorder %s24, 1
      %p59 = por %p57, %p58
      %p61 = scmp.ne.s32.totalorder %s44, %s60
      %p62 = scmp.eq.s32.totalorder %s24, 0
      %p63 = por %p61, %p62
      %s64 = ssub.s32 %s25, %s37
      %s65 = ssub.s32 %s26, %s33
      %s66 = sor.u32 %s64, %s65
      %p67 = scmp.eq.s32.totalorder %s66, 0
      %s69 = sadd.s32 %s68, 1
      %s70 = scalar_select %p67, %s68, %s69
      %p73 = pneg %p67
      %p74 = scmp.eq.s32.totalorder %s18, 1
      %p75 = por %p73, %p74
      %p76 = scmp.ne.s32.totalorder %s68, %s71
      %p77 = scmp.eq.s32.totalorder %s18, 0
      %p78 = por %p76, %p77
      %p79 = scmp.ne.s32.totalorder %s68, %s71
      %p80 = scmp.eq.s32.totalorder %s23, 1
      %p81 = por %p79, %p80
      %p82 = scmp.ne.s32.totalorder %s71, %s72
      %p83 = scmp.eq.s32.totalorder %s23, 0
      %p84 = por %p82, %p83
      %p85 = scmp.ne.s32.totalorder %s71, %s72
      %p86 = scmp.eq.s32.totalorder %s24, 1
      %p87 = por %p85, %p86
      %p89 = scmp.ne.s32.totalorder %s72, %s88
      %p90 = scmp.eq.s32.totalorder %s24, 0
      %p91 = por %p89, %p90
      %s92 = ssub.s32 %s26, %s33
      %p93 = scmp.eq.s32.totalorder %s92, 0
      %s95 = sadd.s32 %s94, 1
      %s96 = scalar_select %p93, %s94, %s95
      %p99 = pneg %p93
      %p100 = scmp.eq.s32.totalorder %s18, 1
      %p101 = por %p99, %p100
      %p102 = scmp.ne.s32.totalorder %s94, %s97
      %p103 = scmp.eq.s32.totalorder %s18, 0
      %p104 = por %p102, %p103
      %p105 = scmp.ne.s32.totalorder %s94, %s97
      %p106 = scmp.eq.s32.totalorder %s23, 1
      %p107 = por %p105, %p106
      %p108 = scmp.ne.s32.totalorder %s97, %s98
      %p109 = scmp.eq.s32.totalorder %s23, 0
      %p110 = por %p108, %p109
      %p111 = scmp.ne.s32.totalorder %s97, %s98
      %p112 = scmp.eq.s32.totalorder %s24, 1
      %p113 = por %p111, %p112
      %p115 = scmp.ne.s32.totalorder %s98, %s114
      %p116 = scmp.eq.s32.totalorder %s24, 0
      %p117 = por %p115, %p116
      %s118 = ssub.s32 %s25, %s37
      %s119 = ssub.s32 %s26, %s33
      %s120 = sor.u32 %s118, %s119
      %p121 = scmp.eq.s32.totalorder %s120, 0
      %s123 = sadd.s32 %s122, 1
      %s124 = scalar_select %p121, %s122, %s123
      %p127 = pneg %p121
      %p128 = scmp.eq.s32.totalorder %s18, 1
      %p129 = por %p127, %p128
      %p130 = scmp.ne.s32.totalorder %s122, %s125
      %p131 = scmp.eq.s32.totalorder %s18, 0
      %p132 = por %p130, %p131
      %p133 = scmp.ne.s32.totalorder %s122, %s125
      %p134 = scmp.eq.s32.totalorder %s23, 1
      %p135 = por %p133, %p134
      %p136 = scmp.ne.s32.totalorder %s125, %s126
      %p137 = scmp.eq.s32.totalorder %s23, 0
      %p138 = por %p136, %p137
      %p139 = scmp.ne.s32.totalorder %s125, %s126
      %p140 = scmp.eq.s32.totalorder %s24, 1
      %p141 = por %p139, %p140
      %p143 = scmp.ne.s32.totalorder %s126, %s142
      %p144 = scmp.eq.s32.totalorder %s24, 0
      %p145 = por %p143, %p144
      %p146 = scmp.le.s32.totalorder 1, %s18
      %p147 = scmp.lt.s32.totalorder %s18, 3
      %p148 = pnand %p146, %p147
      %p149 = pneg %p148
      // Predicated region
      $region9: #{csain_forward.1} parent=5 // pred_check
        _
      $region10: #{csain_forward.1} parent=5 // pred_check_branch
        %151 = sbr.rel (%p148) target = $region12
      $region11: #{csain_forward.1} parent=5 // pred_region
        %s152 = ssub.s32 %s18, 1
        // Predicated region
        $region13: #{csain_forward.1} parent=11 // pred_check
          %p153 = pneg %p110
        $region14: #{csain_forward.1} parent=11 // pred_check_branch
          %155 = sbr.rel (%p153) target = $region16
        $region15: #{csain_forward.1} parent=11 // pred_region
          %s156 = smul.u32 2, %s28
          %s158 = ssub.s32 2304, 2304
          %159 = vsyncadd [#allocation6], %s158
          %s160 = smul.addr %s156, 128
          %s161 = scalar_lea.hbm %s2, %s160
          %s162 = sshll.u32 [#allocation7], 4
          %s163 = int_to_ptr.vmem [resolvable:$true] %s162
          %168 = dma.hbm_to_vmem [thread:$0]  %s161, 2304, %s163, [#allocation6], 128, 128, 8
        $region16: #{csain_forward.1} parent=11 // pred_fallthru
          _
      $region12: #{csain_forward.1} parent=5 // pred_fallthru
        _
      %p169 = scmp.lt.s32.totalorder %s18, 2
      // Predicated region
      $region17: #{csain_forward.1} parent=5 // pred_check
        %p170 = pneg %p169
      $region18: #{csain_forward.1} parent=5 // pred_check_branch
        %172 = sbr.rel (%p170) target = $region20
      $region19: #{csain_forward.1} parent=5 // pred_region
        // Predicated region
        $region21: #{csain_forward.1} parent=19 // pred_check
          %p173 = pneg %p50
        $region22: #{csain_forward.1} parent=19 // pred_check_branch
          %175 = sbr.rel (%p173) target = $region24
        $region23: #{csain_forward.1} parent=19 // pred_region
          %s176 = sand.u32 %s40, 1
          %s177 = scalar_lea.sflag [#allocation3], %s176
          %s178 = sand.u32 %s40, 1
          %s179 = smul.addr %s178, 24
          %s180 = scalar_lea.vmem [#allocation2], %s179
          %s182 = ssub.s32 384, 384
          %183 = vsyncadd %s177, %s182
          %s184 = smul.addr %s25, 3
          %s185 = smul.addr %s184, 128
          %s186 = scalar_lea.hbm %s0, %s185
          %s188 = sshll.u32 %s180, 4
          %s189 = int_to_ptr.vmem [resolvable:$true] %s188
          %191 = dma.hbm_to_vmem [thread:$0]  %s186, 384, %s189, %s177
        $region24: #{csain_forward.1} parent=19 // pred_fallthru
          _
        // Predicated region
        $region25: #{csain_forward.1} parent=19 // pred_check
          %p192 = pneg %p78
        $region26: #{csain_forward.1} parent=19 // pred_check_branch
          %194 = sbr.rel (%p192) target = $region28
        $region27: #{csain_forward.1} parent=19 // pred_region
          %s195 = sand.u32 %s18, 1
          %s196 = scalar_lea.sflag [#allocation6], %s195
          %s197 = sand.u32 %s68, 1
          %s198 = smul.addr %s197, 16
          %s199 = scalar_lea.vmem [#allocation5], %s198
          %s201 = ssub.s32 256, 256
          %202 = vsyncadd %s196, %s201
          %s203 = smul.addr %s26, 2
          %s204 = smul.addr %s25, 2
          %s205 = sadd.s32 %s203, %s204
          %s206 = smul.addr %s205, 128
          %s207 = scalar_lea.hbm %s1, %s206
          %s209 = sshll.u32 %s199, 4
          %s210 = int_to_ptr.vmem [resolvable:$true] %s209
          %212 = dma.hbm_to_vmem [thread:$0]  %s207, 256, %s210, %s196
        $region28: #{csain_forward.1} parent=19 // pred_fallthru
          _
      $region20: #{csain_forward.1} parent=5 // pred_fallthru
        _
      %p213 = scmp.le.s32.totalorder 1, %s18
      %p214 = scmp.lt.s32.totalorder %s18, 3
      %p215 = pnand %p213, %p214
      %p216 = pneg %p215
      // Predicated region
      $region29: #{csain_forward.1} parent=5 // pred_check
        _
      $region30: #{csain_forward.1} parent=5 // pred_check_branch
        %218 = sbr.rel (%p215) target = $region32
      $region31: #{csain_forward.1} parent=5 // pred_region
        %s219 = ssub.s32 %s18, 1
        %s220 = sand.u32 %s43, 1
        %s221 = scalar_lea.sflag [#allocation3], %s220
        %s222 = sand.u32 %s43, 1
        %s223 = smul.addr %s222, 24
        %s224 = scalar_lea.vmem [#allocation2], %s223
        // Predicated region
        $region33: #{csain_forward.1} parent=31 // pred_check
          %p225 = pneg %p56
        $region34: #{csain_forward.1} parent=31 // pred_check_branch
          %227 = sbr.rel (%p225) target = $region36
        $region35: #{csain_forward.1} parent=31 // pred_region
          %228 = dma.done %s221, 384
        $region36: #{csain_forward.1} parent=31 // pred_fallthru
          _
        %s229 = sand.u32 %s23, 1
        %s230 = scalar_lea.sflag [#allocation6], %s229
        %s231 = sand.u32 %s71, 1
        %s232 = smul.addr %s231, 16
        %s233 = scalar_lea.vmem [#allocation5], %s232
        // Predicated region
        $region37: #{csain_forward.1} parent=31 // pred_check
          %p234 = pneg %p84
        $region38: #{csain_forward.1} parent=31 // pred_check_branch
          %236 = sbr.rel (%p234) target = $region40
        $region39: #{csain_forward.1} parent=31 // pred_region
          %237 = dma.done %s230, 256
        $region40: #{csain_forward.1} parent=31 // pred_fallthru
          _
        // Predicated region
        $region41: #{csain_forward.1} parent=31 // pred_check
          %p238 = pneg %p110
        $region42: #{csain_forward.1} parent=31 // pred_check_branch
          %240 = sbr.rel (%p238) target = $region44
        $region43: #{csain_forward.1} parent=31 // pred_region
          %241 = dma.done [#allocation6], 2304
        $region44: #{csain_forward.1} parent=31 // pred_fallthru
          _
        %s242 = sand.u32 %s43, 1
        %s243 = scalar_lea.sflag [#allocation3], %s242
        %s244 = sand.u32 %s43, 1
        %s245 = smul.addr %s244, 24
        %s246 = scalar_lea.vmem [#allocation2], %s245
        %p247 = pneg %p56
        %p248 = pneg %p53
        %s249 = sand.u32 %s23, 1
        %s250 = scalar_lea.sflag [#allocation6], %s249
        %s251 = sand.u32 %s71, 1
        %s252 = smul.addr %s251, 16
        %s253 = scalar_lea.vmem [#allocation5], %s252
        %p254 = pneg %p84
        %p255 = pneg %p81
        %p256 = pneg %p110
        %p257 = pneg %p107
        %p258 = pneg %p138
        %p259 = pneg %p135
        %s260 = sand.u32 %s125, 1
        %s261 = scalar_lea.sflag [#allocation4], %s260
        %s262 = sand.u32 %s125, 1
        %s263 = smul.addr %s262, 16
        %s264 = scalar_lea.vmem [#allocation8], %s263
        %s265 = smul.u32 2, %s28
        %v266 = vld [vmem:[%s224] sm:$0xff]
        %v267 = vld [vmem:[%s224 + $0x8] sm:$0xff]
        %v268 = vld [vmem:[%s224 + $0x10] sm:$0xff]
        %v269 = vlaneseq
        %v270 = vand.u32 %v269, 127
        %v271 = vadd.s32 %v270, 128
        %vm272 = vcmp.lt.s32.totalorder %v270, 0
        %v273 = vsub.s32 0, %v270
        %v274 = vsel %vm272, %v273, %v270
        %v275 = vshrl.u32 %v274, 4
        %v276 = vand.u32 %v274, 15
        %v277 = vsub.s32 0, %v276
        %v278 = vsel %vm272, %v277, %v276
        %vm279 = vcmp.lt.s32.totalorder %v271, 0
        %v280 = vsub.s32 0, %v271
        %v281 = vsel %vm279, %v280, %v271
        %v282 = vshrl.u32 %v281, 4
        %v283 = vand.u32 %v281, 15
        %v284 = vsub.s32 0, %v283
        %v285 = vsel %vm279, %v284, %v283
        %vm286 = vcmp.ne.s32.totalorder %v278, 0
        %vm287 = vcmp.ne.s32.totalorder %v285, 0
        %vm288 = vcmp.lt.s32.totalorder %v278, 0
        %vm289 = vcmp.lt.s32.totalorder %v285, 0
        %vm290 = vmand %vm288, %vm286
        %vm291 = vmand %vm289, %vm287
        %v292 = vadd.s32 %v278, 16
        %v293 = vadd.s32 %v285, 16
        %v294 = vsel %vm290, %v292, %v278
        %v295 = vsel %vm291, %v293, %v285
        %vm296 = vcmp.ne.s32.totalorder %v294, 0
        %vm297 = vcmp.ne.s32.totalorder %v295, 0
        %v298 = vsel %vm296, 1, 0
        %v299 = vsel %vm297, 1, 0
        %v300 = vcvt.s32.f32 %v298
        %v301 = vcvt.s32.f32 %v299
        %vm302 = vcmp.ne.s32.totalorder %v294, 15
        %vm303 = vcmp.ne.s32.totalorder %v295, 15
        %v304 = vsel %vm302, 1, 0
        %v305 = vsel %vm303, 1, 0
        %v306 = vcvt.s32.f32 %v304
        %v307 = vcvt.s32.f32 %v305
        %v308 = vmul.f32 %v266, %v300
        %v309 = vmul.f32 %v267, %v301
        %v310 = vld [vmem:[#allocation7] sm:$0xff]
        %v311 = vld [vmem:[#allocation7 + $0x8] sm:$0xff]
        %s312 = scalar_lea.vmem [#allocation7], 16
        %v313 = vld [vmem:[%s312] sm:$0xff]
        %v314 = vld [vmem:[%s312 + $0x8] sm:$0xff]
        %318 = vrot.lane.b32.xlu0 %v266, 127
        %v319 = vpop.permute.xlu0 %318
        %320 = vrot.lane.b32.xlu0 %v267, 127
        %v321 = vpop.permute.xlu0 %320
        %322 = vrot.lane.b32.xlu0 %v268, 127
        %v323 = vpop.permute.xlu0 %322
        %vm324 = vcmask 1039360
        %v325 = vsel %vm324, %v319, %v321
        %v326 = vsel %vm324, %v321, %v323
        %vm329 = vcmask 64512
        %v331 = vsel %vm329, %v313, 0
        %v334 = vsel %vm329, %v314, 0
        %336 = vmatprep.subr.mxu0 %v326
        %337 = vmatpush1.msra.mxu0 %v325
        %338 = vmatprep.subr.mxu0 0.0
        %339 = vmatpush1.msra.mxu0 0.0
        %340 = vmatprep.subr.mxu0 0.0
        %341 = vmatpush1.msra.mxu0 0.0
        %342 = vmatprep.subr.mxu0 0.0
        %343 = vmatpush1.msra.mxu0 0.0
        %344 = vmatprep.subr.mxu0 0.0
        %345 = vmatpush1.msra.mxu0 0.0
        %346 = vmatprep.subr.mxu0 0.0
        %347 = vmatpush1.msra.mxu0 0.0
        %348 = vmatprep.subr.mxu0 0.0
        %349 = vmatpush1.msra.mxu0 0.0
        %350 = vmatprep.subr.mxu0 0.0
        %351 = vmatpush1.msra.mxu0 0.0
        %352 = vmatprep.subr.mxu0 0.0
        %353 = vmatpush1.msra.mxu0 0.0
        %354 = vmatprep.subr.mxu0 0.0
        %355 = vmatpush1.msra.mxu0 0.0
        %356 = vmatprep.subr.mxu0 0.0
        %357 = vmatpush1.msra.mxu0 0.0
        %358 = vmatprep.subr.mxu0 0.0
        %359 = vmatpush1.msra.mxu0 0.0
        %360 = vmatprep.subr.mxu0 0.0
        %361 = vmatpush1.msra.mxu0 0.0
        %362 = vmatprep.subr.mxu0 0.0
        %363 = vmatpush1.msra.mxu0 0.0
        %364 = vmatprep.subr.mxu0 0.0
        %365 = vmatpush1.msra.mxu0 0.0
        %366 = vmatprep.subr.mxu0 0.0
        %367 = vmatpush1.msra.mxu0 0.0
        %368 = vmatprep.subr.mxu0 0.0
        %369 = vmatpush1.msra.mxu0 0.0
        %370 = vmatprep.subr.mxu0 0.0
        %371 = vmatpush1.msra.mxu0 0.0
        %372 = vmatprep.subr.mxu0 0.0
        %373 = vmatpush1.msra.mxu0 0.0
        %374 = vmatprep.subr.mxu0 0.0
        %375 = vmatpush1.msra.mxu0 0.0
        %376 = vmatprep.subr.mxu0 0.0
        %377 = vmatpush1.msra.mxu0 0.0
        %378 = vmatprep.subr.mxu0 0.0
        %379 = vmatpush1.msra.mxu0 0.0
        %380 = vmatprep.subr.mxu0 0.0
        %381 = vmatpush1.msra.mxu0 0.0
        %382 = vmatprep.subr.mxu0 0.0
        %383 = vmatpush1.msra.mxu0 0.0
        %384 = vmatprep.subr.mxu0 0.0
        %385 = vmatpush1.msra.mxu0 0.0
        %386 = vmatprep.subr.mxu0 0.0
        %387 = vmatpush1.msra.mxu0 0.0
        %388 = vmatprep.subr.mxu0 0.0
        %389 = vmatpush1.msra.mxu0 0.0
        %390 = vmatprep.subr.mxu0 0.0
        %391 = vmatpush1.msra.mxu0 0.0
        %392 = vmatprep.subr.mxu0 0.0
        %393 = vmatpush1.msra.mxu0 0.0
        %394 = vmatprep.subr.mxu0 0.0
        %395 = vmatpush1.msra.mxu0 0.0
        %396 = vmatprep.subr.mxu0 0.0
        %397 = vmatpush1.msra.mxu0 0.0
        %398 = vmatprep.subr.mxu0 0.0
        %399 = vmatpush1.msra.mxu0 0.0
        %400 = vmatprep.mubr.f32.mxu0 0.0
        %401 = vmatmul.mubr.f32.gmra.mrb[0].mxu0 %v331
        %v402 = vpop.f32.mrb[0].mxu0
        %v403 = vadd.f32 0.0, %v402
        %v404 = vpop.f32.mrb[0].mxu0
        %v405 = vadd.f32 0.0, %v404
        %406 = vmatprep.mubr.f32.mxu0 0.0
        %407 = vmatmul.mubr.f32.gmra.mrb[0].mxu0 %v334
        %v408 = vpop.f32.mrb[0].mxu0
        %v409 = vadd.f32 0.0, %v408
        %v410 = vpop.f32.mrb[0].mxu0
        %v411 = vadd.f32 0.0, %v410
        %412 = vdwg.mxu0
        %v414 = vsel %vm329, %v310, 0
        %v417 = vsel %vm329, %v311, 0
        %419 = vmatprep.subr.mxu0 %v309
        %420 = vmatpush1.msra.mxu0 %v308
        %421 = vmatprep.subr.mxu0 0.0
        %422 = vmatpush1.msra.mxu0 0.0
        %423 = vmatprep.subr.mxu0 0.0
        %424 = vmatpush1.msra.mxu0 0.0
        %425 = vmatprep.subr.mxu0 0.0
        %426 = vmatpush1.msra.mxu0 0.0
        %427 = vmatprep.subr.mxu0 0.0
        %428 = vmatpush1.msra.mxu0 0.0
        %429 = vmatprep.subr.mxu0 0.0
        %430 = vmatpush1.msra.mxu0 0.0
        %431 = vmatprep.subr.mxu0 0.0
        %432 = vmatpush1.msra.mxu0 0.0
        %433 = vmatprep.subr.mxu0 0.0
        %434 = vmatpush1.msra.mxu0 0.0
        %435 = vmatprep.subr.mxu0 0.0
        %436 = vmatpush1.msra.mxu0 0.0
        %437 = vmatprep.subr.mxu0 0.0
        %438 = vmatpush1.msra.mxu0 0.0
        %439 = vmatprep.subr.mxu0 0.0
        %440 = vmatpush1.msra.mxu0 0.0
        %441 = vmatprep.subr.mxu0 0.0
        %442 = vmatpush1.msra.mxu0 0.0
        %443 = vmatprep.subr.mxu0 0.0
        %444 = vmatpush1.msra.mxu0 0.0
        %445 = vmatprep.subr.mxu0 0.0
        %446 = vmatpush1.msra.mxu0 0.0
        %447 = vmatprep.subr.mxu0 0.0
        %448 = vmatpush1.msra.mxu0 0.0
        %449 = vmatprep.subr.mxu0 0.0
        %450 = vmatpush1.msra.mxu0 0.0
        %451 = vmatprep.subr.mxu0 0.0
        %452 = vmatpush1.msra.mxu0 0.0
        %453 = vmatprep.subr.mxu0 0.0
        %454 = vmatpush1.msra.mxu0 0.0
        %455 = vmatprep.subr.mxu0 0.0
        %456 = vmatpush1.msra.mxu0 0.0
        %457 = vmatprep.subr.mxu0 0.0
        %458 = vmatpush1.msra.mxu0 0.0
        %459 = vmatprep.subr.mxu0 0.0
        %460 = vmatpush1.msra.mxu0 0.0
        %461 = vmatprep.subr.mxu0 0.0
        %462 = vmatpush1.msra.mxu0 0.0
        %463 = vmatprep.subr.mxu0 0.0
        %464 = vmatpush1.msra.mxu0 0.0
        %465 = vmatprep.subr.mxu0 0.0
        %466 = vmatpush1.msra.mxu0 0.0
        %467 = vmatprep.subr.mxu0 0.0
        %468 = vmatpush1.msra.mxu0 0.0
        %469 = vmatprep.subr.mxu0 0.0
        %470 = vmatpush1.msra.mxu0 0.0
        %471 = vmatprep.subr.mxu0 0.0
        %472 = vmatpush1.msra.mxu0 0.0
        %473 = vmatprep.subr.mxu0 0.0
        %474 = vmatpush1.msra.mxu0 0.0
        %475 = vmatprep.subr.mxu0 0.0
        %476 = vmatpush1.msra.mxu0 0.0
        %477 = vmatprep.subr.mxu0 0.0
        %478 = vmatpush1.msra.mxu0 0.0
        %479 = vmatprep.subr.mxu0 0.0
        %480 = vmatpush1.msra.mxu0 0.0
        %481 = vmatprep.subr.mxu0 0.0
        %482 = vmatpush1.msra.mxu0 0.0
        %483 = vmatprep.mubr.f32.mxu0 0.0
        %484 = vmatmul.mubr.f32.gmra.mrb[0].mxu0 %v414
        %v485 = vpop.f32.mrb[0].mxu0
        %v486 = vadd.f32 %v403, %v485
        %v487 = vpop.f32.mrb[0].mxu0
        %v488 = vadd.f32 %v405, %v487
        %489 = vmatprep.mubr.f32.mxu0 0.0
        %490 = vmatmul.mubr.f32.gmra.mrb[0].mxu0 %v417
        %v491 = vpop.f32.mrb[0].mxu0
        %v492 = vadd.f32 %v409, %v491
        %v493 = vpop.f32.mrb[0].mxu0
        %v494 = vadd.f32 %v411, %v493
        %495 = vdwg.mxu0
        %498 = vrot.lane.b32.xlu0 %v306, 2
        %v499 = vpop.permute.xlu0 %498
        %500 = vrot.lane.b32.xlu0 %v307, 2
        %v501 = vpop.permute.xlu0 %500
        %vm502 = vcmask 15360
        %v503 = vsel %vm502, %v499, %v501
        %v507 = vmul.f32 %v266, %v499
        %v508 = vmul.f32 %v267, %v503
        %v509 = vmul.f32 %v268, %v501
        %s510 = scalar_lea.vmem [#allocation7], 32
        %v511 = vld [vmem:[%s510] sm:$0xff]
        %v512 = vld [vmem:[%s510 + $0x8] sm:$0xff]
        %516 = vrot.lane.b32.xlu0 %v507, 126
        %v517 = vpop.permute.xlu0 %516
        %518 = vrot.lane.b32.xlu0 %v508, 126
        %v519 = vpop.permute.xlu0 %518
        %520 = vrot.lane.b32.xlu0 %v509, 126
        %v521 = vpop.permute.xlu0 %520
        %vm522 = vcmask 1031168
        %v523 = vsel %vm522, %v517, %v519
        %v524 = vsel %vm522, %v519, %v521
        %v528 = vsel %vm329, %v511, 0
        %v531 = vsel %vm329, %v512, 0
        %533 = vmatprep.subr.mxu0 %v524
        %534 = vmatpush1.msra.mxu0 %v523
        %535 = vmatprep.subr.mxu0 0.0
        %536 = vmatpush1.msra.mxu0 0.0
        %537 = vmatprep.subr.mxu0 0.0
        %538 = vmatpush1.msra.mxu0 0.0
        %539 = vmatprep.subr.mxu0 0.0
        %540 = vmatpush1.msra.mxu0 0.0
        %541 = vmatprep.subr.mxu0 0.0
        %542 = vmatpush1.msra.mxu0 0.0
        %543 = vmatprep.subr.mxu0 0.0
        %544 = vmatpush1.msra.mxu0 0.0
        %545 = vmatprep.subr.mxu0 0.0
        %546 = vmatpush1.msra.mxu0 0.0
        %547 = vmatprep.subr.mxu0 0.0
        %548 = vmatpush1.msra.mxu0 0.0
        %549 = vmatprep.subr.mxu0 0.0
        %550 = vmatpush1.msra.mxu0 0.0
        %551 = vmatprep.subr.mxu0 0.0
        %552 = vmatpush1.msra.mxu0 0.0
        %553 = vmatprep.subr.mxu0 0.0
        %554 = vmatpush1.msra.mxu0 0.0
        %555 = vmatprep.subr.mxu0 0.0
        %556 = vmatpush1.msra.mxu0 0.0
        %557 = vmatprep.subr.mxu0 0.0
        %558 = vmatpush1.msra.mxu0 0.0
        %559 = vmatprep.subr.mxu0 0.0
        %560 = vmatpush1.msra.mxu0 0.0
        %561 = vmatprep.subr.mxu0 0.0
        %562 = vmatpush1.msra.mxu0 0.0
        %563 = vmatprep.subr.mxu0 0.0
        %564 = vmatpush1.msra.mxu0 0.0
        %565 = vmatprep.subr.mxu0 0.0
        %566 = vmatpush1.msra.mxu0 0.0
        %567 = vmatprep.subr.mxu0 0.0
        %568 = vmatpush1.msra.mxu0 0.0
        %569 = vmatprep.subr.mxu0 0.0
        %570 = vmatpush1.msra.mxu0 0.0
        %571 = vmatprep.subr.mxu0 0.0
        %572 = vmatpush1.msra.mxu0 0.0
        %573 = vmatprep.subr.mxu0 0.0
        %574 = vmatpush1.msra.mxu0 0.0
        %575 = vmatprep.subr.mxu0 0.0
        %576 = vmatpush1.msra.mxu0 0.0
        %577 = vmatprep.subr.mxu0 0.0
        %578 = vmatpush1.msra.mxu0 0.0
        %579 = vmatprep.subr.mxu0 0.0
        %580 = vmatpush1.msra.mxu0 0.0
        %581 = vmatprep.subr.mxu0 0.0
        %582 = vmatpush1.msra.mxu0 0.0
        %583 = vmatprep.subr.mxu0 0.0
        %584 = vmatpush1.msra.mxu0 0.0
        %585 = vmatprep.subr.mxu0 0.0
        %586 = vmatpush1.msra.mxu0 0.0
        %587 = vmatprep.subr.mxu0 0.0
        %588 = vmatpush1.msra.mxu0 0.0
        %589 = vmatprep.subr.mxu0 0.0
        %590 = vmatpush1.msra.mxu0 0.0
        %591 = vmatprep.subr.mxu0 0.0
        %592 = vmatpush1.msra.mxu0 0.0
        %593 = vmatprep.subr.mxu0 0.0
        %594 = vmatpush1.msra.mxu0 0.0
        %595 = vmatprep.subr.mxu0 0.0
        %596 = vmatpush1.msra.mxu0 0.0
        %597 = vmatprep.mubr.f32.mxu0 0.0
        %598 = vmatmul.mubr.f32.gmra.mrb[0].mxu0 %v528
        %v599 = vpop.f32.mrb[0].mxu0
        %v600 = vadd.f32 0.0, %v599
        %v601 = vpop.f32.mrb[0].mxu0
        %v602 = vadd.f32 0.0, %v601
        %603 = vmatprep.mubr.f32.mxu0 0.0
        %604 = vmatmul.mubr.f32.gmra.mrb[0].mxu0 %v531
        %v605 = vpop.f32.mrb[0].mxu0
        %v606 = vadd.f32 0.0, %v605
        %v607 = vpop.f32.mrb[0].mxu0
        %v608 = vadd.f32 0.0, %v607
        %609 = vdwg.mxu0
        %v610 = vadd.f32 %v486, %v600
        %v611 = vadd.f32 %v488, %v602
        %v612 = vadd.f32 %v492, %v606
        %v613 = vadd.f32 %v494, %v608
        %616 = vrot.lane.b32.xlu0 %v300, 16
        %v617 = vpop.permute.xlu0 %616
        %618 = vrot.lane.b32.xlu0 %v301, 16
        %v619 = vpop.permute.xlu0 %618
        %vm620 = vcmask 130048
        %v621 = vsel %vm620, %v617, %v619
        %v625 = vmul.f32 %v266, %v617
        %v626 = vmul.f32 %v267, %v621
        %v627 = vmul.f32 %v268, %v619
        %s628 = scalar_lea.vmem [#allocation7], 48
        %v629 = vld [vmem:[%s628] sm:$0xff]
        %v630 = vld [vmem:[%s628 + $0x8] sm:$0xff]
        %634 = vrot.lane.b32.xlu0 %v625, 112
        %v635 = vpop.permute.xlu0 %634
        %636 = vrot.lane.b32.xlu0 %v626, 112
        %v637 = vpop.permute.xlu0 %636
        %638 = vrot.lane.b32.xlu0 %v627, 112
        %v639 = vpop.permute.xlu0 %638
        %vm640 = vcmask 916480
        %v641 = vsel %vm640, %v635, %v637
        %v642 = vsel %vm640, %v637, %v639
        %v646 = vsel %vm329, %v629, 0
        %v649 = vsel %vm329, %v630, 0
        %651 = vmatprep.subr.mxu0 %v642
        %652 = vmatpush1.msra.mxu0 %v641
        %653 = vmatprep.subr.mxu0 0.0
        %654 = vmatpush1.msra.mxu0 0.0
        %655 = vmatprep.subr.mxu0 0.0
        %656 = vmatpush1.msra.mxu0 0.0
        %657 = vmatprep.subr.mxu0 0.0
        %658 = vmatpush1.msra.mxu0 0.0
        %659 = vmatprep.subr.mxu0 0.0
        %660 = vmatpush1.msra.mxu0 0.0
        %661 = vmatprep.subr.mxu0 0.0
        %662 = vmatpush1.msra.mxu0 0.0
        %663 = vmatprep.subr.mxu0 0.0
        %664 = vmatpush1.msra.mxu0 0.0
        %665 = vmatprep.subr.mxu0 0.0
        %666 = vmatpush1.msra.mxu0 0.0
        %667 = vmatprep.subr.mxu0 0.0
        %668 = vmatpush1.msra.mxu0 0.0
        %669 = vmatprep.subr.mxu0 0.0
        %670 = vmatpush1.msra.mxu0 0.0
        %671 = vmatprep.subr.mxu0 0.0
        %672 = vmatpush1.msra.mxu0 0.0
        %673 = vmatprep.subr.mxu0 0.0
        %674 = vmatpush1.msra.mxu0 0.0
        %675 = vmatprep.subr.mxu0 0.0
        %676 = vmatpush1.msra.mxu0 0.0
        %677 = vmatprep.subr.mxu0 0.0
        %678 = vmatpush1.msra.mxu0 0.0
        %679 = vmatprep.subr.mxu0 0.0
        %680 = vmatpush1.msra.mxu0 0.0
        %681 = vmatprep.subr.mxu0 0.0
        %682 = vmatpush1.msra.mxu0 0.0
        %683 = vmatprep.subr.mxu0 0.0
        %684 = vmatpush1.msra.mxu0 0.0
        %685 = vmatprep.subr.mxu0 0.0
        %686 = vmatpush1.msra.mxu0 0.0
        %687 = vmatprep.subr.mxu0 0.0
        %688 = vmatpush1.msra.mxu0 0.0
        %689 = vmatprep.subr.mxu0 0.0
        %690 = vmatpush1.msra.mxu0 0.0
        %691 = vmatprep.subr.mxu0 0.0
        %692 = vmatpush1.msra.mxu0 0.0
        %693 = vmatprep.subr.mxu0 0.0
        %694 = vmatpush1.msra.mxu0 0.0
        %695 = vmatprep.subr.mxu0 0.0
        %696 = vmatpush1.msra.mxu0 0.0
        %697 = vmatprep.subr.mxu0 0.0
        %698 = vmatpush1.msra.mxu0 0.0
        %699 = vmatprep.subr.mxu0 0.0
        %700 = vmatpush1.msra.mxu0 0.0
        %701 = vmatprep.subr.mxu0 0.0
        %702 = vmatpush1.msra.mxu0 0.0
        %703 = vmatprep.subr.mxu0 0.0
        %704 = vmatpush1.msra.mxu0 0.0
        %705 = vmatprep.subr.mxu0 0.0
        %706 = vmatpush1.msra.mxu0 0.0
        %707 = vmatprep.subr.mxu0 0.0
        %708 = vmatpush1.msra.mxu0 0.0
        %709 = vmatprep.subr.mxu0 0.0
        %710 = vmatpush1.msra.mxu0 0.0
        %711 = vmatprep.subr.mxu0 0.0
        %712 = vmatpush1.msra.mxu0 0.0
        %713 = vmatprep.subr.mxu0 0.0
        %714 = vmatpush1.msra.mxu0 0.0
        %715 = vmatprep.mubr.f32.mxu0 0.0
        %716 = vmatmul.mubr.f32.gmra.mrb[0].mxu0 %v646
        %v717 = vpop.f32.mrb[0].mxu0
        %v718 = vadd.f32 0.0, %v717
        %v719 = vpop.f32.mrb[0].mxu0
        %v720 = vadd.f32 0.0, %v719
        %721 = vmatprep.mubr.f32.mxu0 0.0
        %722 = vmatmul.mubr.f32.gmra.mrb[0].mxu0 %v649
        %v723 = vpop.f32.mrb[0].mxu0
        %v724 = vadd.f32 0.0, %v723
        %v725 = vpop.f32.mrb[0].mxu0
        %v726 = vadd.f32 0.0, %v725
        %727 = vdwg.mxu0
        %v728 = vadd.f32 %v610, %v718
        %v729 = vadd.f32 %v611, %v720
        %v730 = vadd.f32 %v612, %v724
        %v731 = vadd.f32 %v613, %v726
        %s732 = scalar_lea.vmem [#allocation7], 64
        %v733 = vld [vmem:[%s732] sm:$0xff]
        %v734 = vld [vmem:[%s732 + $0x8] sm:$0xff]
        %735 = vrot.lane.b32.xlu0 %v266, 111
        %v736 = vpop.permute.xlu0 %735
        %737 = vrot.lane.b32.xlu0 %v267, 111
        %v738 = vpop.permute.xlu0 %737
        %739 = vrot.lane.b32.xlu0 %v268, 111
        %v740 = vpop.permute.xlu0 %739
        %vm741 = vcmask 908288
        %v742 = vsel %vm741, %v736, %v738
        %v743 = vsel %vm741, %v738, %v740
        %v747 = vsel %vm329, %v733, 0
        %v750 = vsel %vm329, %v734, 0
        %752 = vmatprep.subr.mxu0 %v743
        %753 = vmatpush1.msra.mxu0 %v742
        %754 = vmatprep.subr.mxu0 0.0
        %755 = vmatpush1.msra.mxu0 0.0
        %756 = vmatprep.subr.mxu0 0.0
        %757 = vmatpush1.msra.mxu0 0.0
        %758 = vmatprep.subr.mxu0 0.0
        %759 = vmatpush1.msra.mxu0 0.0
        %760 = vmatprep.subr.mxu0 0.0
        %761 = vmatpush1.msra.mxu0 0.0
        %762 = vmatprep.subr.mxu0 0.0
        %763 = vmatpush1.msra.mxu0 0.0
        %764 = vmatprep.subr.mxu0 0.0
        %765 = vmatpush1.msra.mxu0 0.0
        %766 = vmatprep.subr.mxu0 0.0
        %767 = vmatpush1.msra.mxu0 0.0
        %768 = vmatprep.subr.mxu0 0.0
        %769 = vmatpush1.msra.mxu0 0.0
        %770 = vmatprep.subr.mxu0 0.0
        %771 = vmatpush1.msra.mxu0 0.0
        %772 = vmatprep.subr.mxu0 0.0
        %773 = vmatpush1.msra.mxu0 0.0
        %774 = vmatprep.subr.mxu0 0.0
        %775 = vmatpush1.msra.mxu0 0.0
        %776 = vmatprep.subr.mxu0 0.0
        %777 = vmatpush1.msra.mxu0 0.0
        %778 = vmatprep.subr.mxu0 0.0
        %779 = vmatpush1.msra.mxu0 0.0
        %780 = vmatprep.subr.mxu0 0.0
        %781 = vmatpush1.msra.mxu0 0.0
        %782 = vmatprep.subr.mxu0 0.0
        %783 = vmatpush1.msra.mxu0 0.0
        %784 = vmatprep.subr.mxu0 0.0
        %785 = vmatpush1.msra.mxu0 0.0
        %786 = vmatprep.subr.mxu0 0.0
        %787 = vmatpush1.msra.mxu0 0.0
        %788 = vmatprep.subr.mxu0 0.0
        %789 = vmatpush1.msra.mxu0 0.0
        %790 = vmatprep.subr.mxu0 0.0
        %791 = vmatpush1.msra.mxu0 0.0
        %792 = vmatprep.subr.mxu0 0.0
        %793 = vmatpush1.msra.mxu0 0.0
        %794 = vmatprep.subr.mxu0 0.0
        %795 = vmatpush1.msra.mxu0 0.0
        %796 = vmatprep.subr.mxu0 0.0
        %797 = vmatpush1.msra.mxu0 0.0
        %798 = vmatprep.subr.mxu0 0.0
        %799 = vmatpush1.msra.mxu0 0.0
        %800 = vmatprep.subr.mxu0 0.0
        %801 = vmatpush1.msra.mxu0 0.0
        %802 = vmatprep.subr.mxu0 0.0
        %803 = vmatpush1.msra.mxu0 0.0
        %804 = vmatprep.subr.mxu0 0.0
        %805 = vmatpush1.msra.mxu0 0.0
        %806 = vmatprep.subr.mxu0 0.0
        %807 = vmatpush1.msra.mxu0 0.0
        %808 = vmatprep.subr.mxu0 0.0
        %809 = vmatpush1.msra.mxu0 0.0
        %810 = vmatprep.subr.mxu0 0.0
        %811 = vmatpush1.msra.mxu0 0.0
        %812 = vmatprep.subr.mxu0 0.0
        %813 = vmatpush1.msra.mxu0 0.0
        %814 = vmatprep.subr.mxu0 0.0
        %815 = vmatpush1.msra.mxu0 0.0
        %816 = vmatprep.mubr.f32.mxu0 0.0
        %817 = vmatmul.mubr.f32.gmra.mrb[0].mxu0 %v747
        %v818 = vpop.f32.mrb[0].mxu0
        %v819 = vadd.f32 0.0, %v818
        %v820 = vpop.f32.mrb[0].mxu0
        %v821 = vadd.f32 0.0, %v820
        %822 = vmatprep.mubr.f32.mxu0 0.0
        %823 = vmatmul.mubr.f32.gmra.mrb[0].mxu0 %v750
        %v824 = vpop.f32.mrb[0].mxu0
        %v825 = vadd.f32 0.0, %v824
        %v826 = vpop.f32.mrb[0].mxu0
        %v827 = vadd.f32 0.0, %v826
        %828 = vdwg.mxu0
        %v829 = vadd.f32 %v728, %v819
        %v830 = vadd.f32 %v729, %v821
        %v831 = vadd.f32 %v730, %v825
        %v832 = vadd.f32 %v731, %v827
        %833 = vrot.lane.b32.xlu0 %v306, 18
        %v834 = vpop.permute.xlu0 %833
        %835 = vrot.lane.b32.xlu0 %v307, 18
        %v836 = vpop.permute.xlu0 %835
        %vm837 = vcmask 146432
        %v838 = vsel %vm837, %v834, %v836
        %v842 = vmul.f32 %v266, %v834
        %v843 = vmul.f32 %v267, %v838
        %v844 = vmul.f32 %v268, %v836
        %s845 = scalar_lea.vmem [#allocation7], 80
        %v846 = vld [vmem:[%s845] sm:$0xff]
        %v847 = vld [vmem:[%s845 + $0x8] sm:$0xff]
        %851 = vrot.lane.b32.xlu0 %v842, 110
        %v852 = vpop.permute.xlu0 %851
        %853 = vrot.lane.b32.xlu0 %v843, 110
        %v854 = vpop.permute.xlu0 %853
        %855 = vrot.lane.b32.xlu0 %v844, 110
        %v856 = vpop.permute.xlu0 %855
        %vm857 = vcmask 900096
        %v858 = vsel %vm857, %v852, %v854
        %v859 = vsel %vm857, %v854, %v856
        %v863 = vsel %vm329, %v846, 0
        %v866 = vsel %vm329, %v847, 0
        %868 = vmatprep.subr.mxu0 %v859
        %869 = vmatpush1.msra.mxu0 %v858
        %870 = vmatprep.subr.mxu0 0.0
        %871 = vmatpush1.msra.mxu0 0.0
        %872 = vmatprep.subr.mxu0 0.0
        %873 = vmatpush1.msra.mxu0 0.0
        %874 = vmatprep.subr.mxu0 0.0
        %875 = vmatpush1.msra.mxu0 0.0
        %876 = vmatprep.subr.mxu0 0.0
        %877 = vmatpush1.msra.mxu0 0.0
        %878 = vmatprep.subr.mxu0 0.0
        %879 = vmatpush1.msra.mxu0 0.0
        %880 = vmatprep.subr.mxu0 0.0
        %881 = vmatpush1.msra.mxu0 0.0
        %882 = vmatprep.subr.mxu0 0.0
        %883 = vmatpush1.msra.mxu0 0.0
        %884 = vmatprep.subr.mxu0 0.0
        %885 = vmatpush1.msra.mxu0 0.0
        %886 = vmatprep.subr.mxu0 0.0
        %887 = vmatpush1.msra.mxu0 0.0
        %888 = vmatprep.subr.mxu0 0.0
        %889 = vmatpush1.msra.mxu0 0.0
        %890 = vmatprep.subr.mxu0 0.0
        %891 = vmatpush1.msra.mxu0 0.0
        %892 = vmatprep.subr.mxu0 0.0
        %893 = vmatpush1.msra.mxu0 0.0
        %894 = vmatprep.subr.mxu0 0.0
        %895 = vmatpush1.msra.mxu0 0.0
        %896 = vmatprep.subr.mxu0 0.0
        %897 = vmatpush1.msra.mxu0 0.0
        %898 = vmatprep.subr.mxu0 0.0
        %899 = vmatpush1.msra.mxu0 0.0
        %900 = vmatprep.subr.mxu0 0.0
        %901 = vmatpush1.msra.mxu0 0.0
        %902 = vmatprep.subr.mxu0 0.0
        %903 = vmatpush1.msra.mxu0 0.0
        %904 = vmatprep.subr.mxu0 0.0
        %905 = vmatpush1.msra.mxu0 0.0
        %906 = vmatprep.subr.mxu0 0.0
        %907 = vmatpush1.msra.mxu0 0.0
        %908 = vmatprep.subr.mxu0 0.0
        %909 = vmatpush1.msra.mxu0 0.0
        %910 = vmatprep.subr.mxu0 0.0
        %911 = vmatpush1.msra.mxu0 0.0
        %912 = vmatprep.subr.mxu0 0.0
        %913 = vmatpush1.msra.mxu0 0.0
        %914 = vmatprep.subr.mxu0 0.0
        %915 = vmatpush1.msra.mxu0 0.0
        %916 = vmatprep.subr.mxu0 0.0
        %917 = vmatpush1.msra.mxu0 0.0
        %918 = vmatprep.subr.mxu0 0.0
        %919 = vmatpush1.msra.mxu0 0.0
        %920 = vmatprep.subr.mxu0 0.0
        %921 = vmatpush1.msra.mxu0 0.0
        %922 = vmatprep.subr.mxu0 0.0
        %923 = vmatpush1.msra.mxu0 0.0
        %924 = vmatprep.subr.mxu0 0.0
        %925 = vmatpush1.msra.mxu0 0.0
        %926 = vmatprep.subr.mxu0 0.0
        %927 = vmatpush1.msra.mxu0 0.0
        %928 = vmatprep.subr.mxu0 0.0
        %929 = vmatpush1.msra.mxu0 0.0
        %930 = vmatprep.subr.mxu0 0.0
        %931 = vmatpush1.msra.mxu0 0.0
        %932 = vmatprep.mubr.f32.mxu0 0.0
        %933 = vmatmul.mubr.f32.gmra.mrb[0].mxu0 %v863
        %v934 = vpop.f32.mrb[0].mxu0
        %v935 = vadd.f32 0.0, %v934
        %v936 = vpop.f32.mrb[0].mxu0
        %v937 = vadd.f32 0.0, %v936
        %938 = vmatprep.mubr.f32.mxu0 0.0
        %939 = vmatmul.mubr.f32.gmra.mrb[0].mxu0 %v866
        %v940 = vpop.f32.mrb[0].mxu0
        %v941 = vadd.f32 0.0, %v940
        %v942 = vpop.f32.mrb[0].mxu0
        %v943 = vadd.f32 0.0, %v942
        %944 = vdwg.mxu0
        %v945 = vadd.f32 %v829, %v935
        %v946 = vadd.f32 %v830, %v937
        %v947 = vadd.f32 %v831, %v941
        %v948 = vadd.f32 %v832, %v943
        %949 = vrot.lane.b32.xlu0 %v300, 32
        %v950 = vpop.permute.xlu0 %949
        %951 = vrot.lane.b32.xlu0 %v301, 32
        %v952 = vpop.permute.xlu0 %951
        %vm953 = vcmask 261120
        %v954 = vsel %vm953, %v950, %v952
        %v958 = vmul.f32 %v266, %v950
        %v959 = vmul.f32 %v267, %v954
        %v960 = vmul.f32 %v268, %v952
        %s961 = scalar_lea.vmem [#allocation7], 96
        %v962 = vld [vmem:[%s961] sm:$0xff]
        %v963 = vld [vmem:[%s961 + $0x8] sm:$0xff]
        %967 = vrot.lane.b32.xlu0 %v958, 96
        %v968 = vpop.permute.xlu0 %967
        %969 = vrot.lane.b32.xlu0 %v959, 96
        %v970 = vpop.permute.xlu0 %969
        %971 = vrot.lane.b32.xlu0 %v960, 96
        %v972 = vpop.permute.xlu0 %971
        %vm973 = vcmask 785408
        %v974 = vsel %vm973, %v968, %v970
        %v975 = vsel %vm973, %v970, %v972
        %v979 = vsel %vm329, %v962, 0
        %v982 = vsel %vm329, %v963, 0
        %984 = vmatprep.subr.mxu0 %v975
        %985 = vmatpush1.msra.mxu0 %v974
        %986 = vmatprep.subr.mxu0 0.0
        %987 = vmatpush1.msra.mxu0 0.0
        %988 = vmatprep.subr.mxu0 0.0
        %989 = vmatpush1.msra.mxu0 0.0
        %990 = vmatprep.subr.mxu0 0.0
        %991 = vmatpush1.msra.mxu0 0.0
        %992 = vmatprep.subr.mxu0 0.0
        %993 = vmatpush1.msra.mxu0 0.0
        %994 = vmatprep.subr.mxu0 0.0
        %995 = vmatpush1.msra.mxu0 0.0
        %996 = vmatprep.subr.mxu0 0.0
        %997 = vmatpush1.msra.mxu0 0.0
        %998 = vmatprep.subr.mxu0 0.0
        %999 = vmatpush1.msra.mxu0 0.0
        %1000 = vmatprep.subr.mxu0 0.0
        %1001 = vmatpush1.msra.mxu0 0.0
        %1002 = vmatprep.subr.mxu0 0.0
        %1003 = vmatpush1.msra.mxu0 0.0
        %1004 = vmatprep.subr.mxu0 0.0
        %1005 = vmatpush1.msra.mxu0 0.0
        %1006 = vmatprep.subr.mxu0 0.0
        %1007 = vmatpush1.msra.mxu0 0.0
        %1008 = vmatprep.subr.mxu0 0.0
        %1009 = vmatpush1.msra.mxu0 0.0
        %1010 = vmatprep.subr.mxu0 0.0
        %1011 = vmatpush1.msra.mxu0 0.0
        %1012 = vmatprep.subr.mxu0 0.0
        %1013 = vmatpush1.msra.mxu0 0.0
        %1014 = vmatprep.subr.mxu0 0.0
        %1015 = vmatpush1.msra.mxu0 0.0
        %1016 = vmatprep.subr.mxu0 0.0
        %1017 = vmatpush1.msra.mxu0 0.0
        %1018 = vmatprep.subr.mxu0 0.0
        %1019 = vmatpush1.msra.mxu0 0.0
        %1020 = vmatprep.subr.mxu0 0.0
        %1021 = vmatpush1.msra.mxu0 0.0
        %1022 = vmatprep.subr.mxu0 0.0
        %1023 = vmatpush1.msra.mxu0 0.0
        %1024 = vmatprep.subr.mxu0 0.0
        %1025 = vmatpush1.msra.mxu0 0.0
        %1026 = vmatprep.subr.mxu0 0.0
        %1027 = vmatpush1.msra.mxu0 0.0
        %1028 = vmatprep.subr.mxu0 0.0
        %1029 = vmatpush1.msra.mxu0 0.0
        %1030 = vmatprep.subr.mxu0 0.0
        %1031 = vmatpush1.msra.mxu0 0.0
        %1032 = vmatprep.subr.mxu0 0.0
        %1033 = vmatpush1.msra.mxu0 0.0
        %1034 = vmatprep.subr.mxu0 0.0
        %1035 = vmatpush1.msra.mxu0 0.0
        %1036 = vmatprep.subr.mxu0 0.0
        %1037 = vmatpush1.msra.mxu0 0.0
        %1038 = vmatprep.subr.mxu0 0.0
        %1039 = vmatpush1.msra.mxu0 0.0
        %1040 = vmatprep.subr.mxu0 0.0
        %1041 = vmatpush1.msra.mxu0 0.0
        %1042 = vmatprep.subr.mxu0 0.0
        %1043 = vmatpush1.msra.mxu0 0.0
        %1044 = vmatprep.subr.mxu0 0.0
        %1045 = vmatpush1.msra.mxu0 0.0
        %1046 = vmatprep.subr.mxu0 0.0
        %1047 = vmatpush1.msra.mxu0 0.0
        %1048 = vmatprep.mubr.f32.mxu0 0.0
        %1049 = vmatmul.mubr.f32.gmra.mrb[0].mxu0 %v979
        %v1050 = vpop.f32.mrb[0].mxu0
        %v1051 = vadd.f32 0.0, %v1050
        %v1052 = vpop.f32.mrb[0].mxu0
        %v1053 = vadd.f32 0.0, %v1052
        %1054 = vmatprep.mubr.f32.mxu0 0.0
        %1055 = vmatmul.mubr.f32.gmra.mrb[0].mxu0 %v982
        %v1056 = vpop.f32.mrb[0].mxu0
        %v1057 = vadd.f32 0.0, %v1056
        %v1058 = vpop.f32.mrb[0].mxu0
        %v1059 = vadd.f32 0.0, %v1058
        %1060 = vdwg.mxu0
        %v1061 = vadd.f32 %v945, %v1051
        %v1062 = vadd.f32 %v946, %v1053
        %v1063 = vadd.f32 %v947, %v1057
        %v1064 = vadd.f32 %v948, %v1059
        %s1065 = scalar_lea.vmem [#allocation7], 112
        %v1066 = vld [vmem:[%s1065] sm:$0xff]
        %v1067 = vld [vmem:[%s1065 + $0x8] sm:$0xff]
        %1068 = vrot.lane.b32.xlu0 %v266, 95
        %v1069 = vpop.permute.xlu0 %1068
        %1070 = vrot.lane.b32.xlu0 %v267, 95
        %v1071 = vpop.permute.xlu0 %1070
        %1072 = vrot.lane.b32.xlu0 %v268, 95
        %v1073 = vpop.permute.xlu0 %1072
        %vm1074 = vcmask 777216
        %v1075 = vsel %vm1074, %v1069, %v1071
        %v1076 = vsel %vm1074, %v1071, %v1073
        %v1080 = vsel %vm329, %v1066, 0
        %v1083 = vsel %vm329, %v1067, 0
        %1085 = vmatprep.subr.mxu0 %v1076
        %1086 = vmatpush1.msra.mxu0 %v1075
        %1087 = vmatprep.subr.mxu0 0.0
        %1088 = vmatpush1.msra.mxu0 0.0
        %1089 = vmatprep.subr.mxu0 0.0
        %1090 = vmatpush1.msra.mxu0 0.0
        %1091 = vmatprep.subr.mxu0 0.0
        %1092 = vmatpush1.msra.mxu0 0.0
        %1093 = vmatprep.subr.mxu0 0.0
        %1094 = vmatpush1.msra.mxu0 0.0
        %1095 = vmatprep.subr.mxu0 0.0
        %1096 = vmatpush1.msra.mxu0 0.0
        %1097 = vmatprep.subr.mxu0 0.0
        %1098 = vmatpush1.msra.mxu0 0.0
        %1099 = vmatprep.subr.mxu0 0.0
        %1100 = vmatpush1.msra.mxu0 0.0
        %1101 = vmatprep.subr.mxu0 0.0
        %1102 = vmatpush1.msra.mxu0 0.0
        %1103 = vmatprep.subr.mxu0 0.0
        %1104 = vmatpush1.msra.mxu0 0.0
        %1105 = vmatprep.subr.mxu0 0.0
        %1106 = vmatpush1.msra.mxu0 0.0
        %1107 = vmatprep.subr.mxu0 0.0
        %1108 = vmatpush1.msra.mxu0 0.0
        %1109 = vmatprep.subr.mxu0 0.0
        %1110 = vmatpush1.msra.mxu0 0.0
        %1111 = vmatprep.subr.mxu0 0.0
        %1112 = vmatpush1.msra.mxu0 0.0
        %1113 = vmatprep.subr.mxu0 0.0
        %1114 = vmatpush1.msra.mxu0 0.0
        %1115 = vmatprep.subr.mxu0 0.0
        %1116 = vmatpush1.msra.mxu0 0.0
        %1117 = vmatprep.subr.mxu0 0.0
        %1118 = vmatpush1.msra.mxu0 0.0
        %1119 = vmatprep.subr.mxu0 0.0
        %1120 = vmatpush1.msra.mxu0 0.0
        %1121 = vmatprep.subr.mxu0 0.0
        %1122 = vmatpush1.msra.mxu0 0.0
        %1123 = vmatprep.subr.mxu0 0.0
        %1124 = vmatpush1.msra.mxu0 0.0
        %1125 = vmatprep.subr.mxu0 0.0
        %1126 = vmatpush1.msra.mxu0 0.0
        %1127 = vmatprep.subr.mxu0 0.0
        %1128 = vmatpush1.msra.mxu0 0.0
        %1129 = vmatprep.subr.mxu0 0.0
        %1130 = vmatpush1.msra.mxu0 0.0
        %1131 = vmatprep.subr.mxu0 0.0
        %1132 = vmatpush1.msra.mxu0 0.0
        %1133 = vmatprep.subr.mxu0 0.0
        %1134 = vmatpush1.msra.mxu0 0.0
        %1135 = vmatprep.subr.mxu0 0.0
        %1136 = vmatpush1.msra.mxu0 0.0
        %1137 = vmatprep.subr.mxu0 0.0
        %1138 = vmatpush1.msra.mxu0 0.0
        %1139 = vmatprep.subr.mxu0 0.0
        %1140 = vmatpush1.msra.mxu0 0.0
        %1141 = vmatprep.subr.mxu0 0.0
        %1142 = vmatpush1.msra.mxu0 0.0
        %1143 = vmatprep.subr.mxu0 0.0
        %1144 = vmatpush1.msra.mxu0 0.0
        %1145 = vmatprep.subr.mxu0 0.0
        %1146 = vmatpush1.msra.mxu0 0.0
        %1147 = vmatprep.subr.mxu0 0.0
        %1148 = vmatpush1.msra.mxu0 0.0
        %1149 = vmatprep.mubr.f32.mxu0 0.0
        %1150 = vmatmul.mubr.f32.gmra.mrb[0].mxu0 %v1080
        %v1151 = vpop.f32.mrb[0].mxu0
        %v1152 = vadd.f32 0.0, %v1151
        %v1153 = vpop.f32.mrb[0].mxu0
        %v1154 = vadd.f32 0.0, %v1153
        %1155 = vmatprep.mubr.f32.mxu0 0.0
        %1156 = vmatmul.mubr.f32.gmra.mrb[0].mxu0 %v1083
        %v1157 = vpop.f32.mrb[0].mxu0
        %v1158 = vadd.f32 0.0, %v1157
        %v1159 = vpop.f32.mrb[0].mxu0
        %v1160 = vadd.f32 0.0, %v1159
        %1161 = vdwg.mxu0
        %v1162 = vadd.f32 %v1061, %v1152
        %v1163 = vadd.f32 %v1062, %v1154
        %v1164 = vadd.f32 %v1063, %v1158
        %v1165 = vadd.f32 %v1064, %v1160
        %1166 = vrot.lane.b32.xlu0 %v306, 34
        %v1167 = vpop.permute.xlu0 %1166
        %1168 = vrot.lane.b32.xlu0 %v307, 34
        %v1169 = vpop.permute.xlu0 %1168
        %vm1170 = vcmask 277504
        %v1171 = vsel %vm1170, %v1167, %v1169
        %v1175 = vmul.f32 %v266, %v1167
        %v1176 = vmul.f32 %v267, %v1171
        %v1177 = vmul.f32 %v268, %v1169
        %s1178 = scalar_lea.vmem [#allocation7], 128
        %v1179 = vld [vmem:[%s1178] sm:$0xff]
        %v1180 = vld [vmem:[%s1178 + $0x8] sm:$0xff]
        %1184 = vrot.lane.b32.xlu0 %v1175, 94
        %v1185 = vpop.permute.xlu0 %1184
        %1186 = vrot.lane.b32.xlu0 %v1176, 94
        %v1187 = vpop.permute.xlu0 %1186
        %1188 = vrot.lane.b32.xlu0 %v1177, 94
        %v1189 = vpop.permute.xlu0 %1188
        %vm1190 = vcmask 769024
        %v1191 = vsel %vm1190, %v1185, %v1187
        %v1192 = vsel %vm1190, %v1187, %v1189
        %v1196 = vsel %vm329, %v1179, 0
        %v1199 = vsel %vm329, %v1180, 0
        %1201 = vmatprep.subr.mxu0 %v1192
        %1202 = vmatpush1.msra.mxu0 %v1191
        %1203 = vmatprep.subr.mxu0 0.0
        %1204 = vmatpush1.msra.mxu0 0.0
        %1205 = vmatprep.subr.mxu0 0.0
        %1206 = vmatpush1.msra.mxu0 0.0
        %1207 = vmatprep.subr.mxu0 0.0
        %1208 = vmatpush1.msra.mxu0 0.0
        %1209 = vmatprep.subr.mxu0 0.0
        %1210 = vmatpush1.msra.mxu0 0.0
        %1211 = vmatprep.subr.mxu0 0.0
        %1212 = vmatpush1.msra.mxu0 0.0
        %1213 = vmatprep.subr.mxu0 0.0
        %1214 = vmatpush1.msra.mxu0 0.0
        %1215 = vmatprep.subr.mxu0 0.0
        %1216 = vmatpush1.msra.mxu0 0.0
        %1217 = vmatprep.subr.mxu0 0.0
        %1218 = vmatpush1.msra.mxu0 0.0
        %1219 = vmatprep.subr.mxu0 0.0
        %1220 = vmatpush1.msra.mxu0 0.0
        %1221 = vmatprep.subr.mxu0 0.0
        %1222 = vmatpush1.msra.mxu0 0.0
        %1223 = vmatprep.subr.mxu0 0.0
        %1224 = vmatpush1.msra.mxu0 0.0
        %1225 = vmatprep.subr.mxu0 0.0
        %1226 = vmatpush1.msra.mxu0 0.0
        %1227 = vmatprep.subr.mxu0 0.0
        %1228 = vmatpush1.msra.mxu0 0.0
        %1229 = vmatprep.subr.mxu0 0.0
        %1230 = vmatpush1.msra.mxu0 0.0
        %1231 = vmatprep.subr.mxu0 0.0
        %1232 = vmatpush1.msra.mxu0 0.0
        %1233 = vmatprep.subr.mxu0 0.0
        %1234 = vmatpush1.msra.mxu0 0.0
        %1235 = vmatprep.subr.mxu0 0.0
        %1236 = vmatpush1.msra.mxu0 0.0
        %1237 = vmatprep.subr.mxu0 0.0
        %1238 = vmatpush1.msra.mxu0 0.0
        %1239 = vmatprep.subr.mxu0 0.0
        %1240 = vmatpush1.msra.mxu0 0.0
        %1241 = vmatprep.subr.mxu0 0.0
        %1242 = vmatpush1.msra.mxu0 0.0
        %1243 = vmatprep.subr.mxu0 0.0
        %1244 = vmatpush1.msra.mxu0 0.0
        %1245 = vmatprep.subr.mxu0 0.0
        %1246 = vmatpush1.msra.mxu0 0.0
        %1247 = vmatprep.subr.mxu0 0.0
        %1248 = vmatpush1.msra.mxu0 0.0
        %1249 = vmatprep.subr.mxu0 0.0
        %1250 = vmatpush1.msra.mxu0 0.0
        %1251 = vmatprep.subr.mxu0 0.0
        %1252 = vmatpush1.msra.mxu0 0.0
        %1253 = vmatprep.subr.mxu0 0.0
        %1254 = vmatpush1.msra.mxu0 0.0
        %1255 = vmatprep.subr.mxu0 0.0
        %1256 = vmatpush1.msra.mxu0 0.0
        %1257 = vmatprep.subr.mxu0 0.0
        %1258 = vmatpush1.msra.mxu0 0.0
        %1259 = vmatprep.subr.mxu0 0.0
        %1260 = vmatpush1.msra.mxu0 0.0
        %1261 = vmatprep.subr.mxu0 0.0
        %1262 = vmatpush1.msra.mxu0 0.0
        %1263 = vmatprep.subr.mxu0 0.0
        %1264 = vmatpush1.msra.mxu0 0.0
        %1265 = vmatprep.mubr.f32.mxu0 0.0
        %1266 = vmatmul.mubr.f32.gmra.mrb[0].mxu0 %v1196
        %v1267 = vpop.f32.mrb[0].mxu0
        %v1268 = vadd.f32 0.0, %v1267
        %v1269 = vpop.f32.mrb[0].mxu0
        %v1270 = vadd.f32 0.0, %v1269
        %1271 = vmatprep.mubr.f32.mxu0 0.0
        %1272 = vmatmul.mubr.f32.gmra.mrb[0].mxu0 %v1199
        %v1273 = vpop.f32.mrb[0].mxu0
        %v1274 = vadd.f32 0.0, %v1273
        %v1275 = vpop.f32.mrb[0].mxu0
        %v1276 = vadd.f32 0.0, %v1275
        %1277 = vdwg.mxu0
        %v1278 = vadd.f32 %v1162, %v1268
        %v1279 = vadd.f32 %v1163, %v1270
        %v1280 = vadd.f32 %v1164, %v1274
        %v1281 = vadd.f32 %v1165, %v1276
        %vm1282 = vcmp.gt.f32.partialorder %v1278, 0.0
        %vm1283 = vcmp.gt.f32.partialorder %v1279, 0.0
        %vm1284 = vcmp.gt.f32.partialorder %v1280, 0.0
        %vm1285 = vcmp.gt.f32.partialorder %v1281, 0.0
        %v1286 = vmul.f32 %v1278, 0.2
        %v1287 = vmul.f32 %v1279, 0.2
        %v1288 = vmul.f32 %v1280, 0.2
        %v1289 = vmul.f32 %v1281, 0.2
        %v1290 = vsel %vm1282, %v1278, %v1286
        %v1291 = vsel %vm1283, %v1279, %v1287
        %v1292 = vsel %vm1284, %v1280, %v1288
        %v1293 = vsel %vm1285, %v1281, %v1289
        %v1294 = vld [vmem:[%s233] sm:$0xff]
        %v1295 = vld [vmem:[%s233 + $0x8] sm:$0xff]
        %v1296 = vadd.f32 %v1294, %v1295
        %1297 = vadd.xlane.f32.xlu0 %v1296
        %v1298 = vpop.xlane.xlu0 %1297
        %v1299 = vmul.f32 %v1294, %v1294
        %v1300 = vmul.f32 %v1295, %v1295
        %v1301 = vadd.f32 %v1299, %v1300
        %1302 = vadd.xlane.f32.xlu0 %v1301
        %v1303 = vpop.xlane.xlu0 %1302
        %v1304 = vmul.f32 %v1298, 0.00390625
        %v1305 = vmul.f32 %v1303, 0.00390625
        %v1306 = vmul.f32 %v1304, %v1304
        %v1307 = vsub.f32 %v1305, %v1306
        %v1308 = vmax.f32 %v1307, 0.0
        %v1309 = vsub.f32 %v1294, %v1304
        %v1310 = vsub.f32 %v1295, %v1304
        %v1311 = vadd.f32 %v1308, 1e-05
        %v1312 = vrsqrt.pop %v1311
        %v1313 = vmul.f32 %v1309, %v1312
        %v1314 = vmul.f32 %v1310, %v1312
        %v1315 = vadd.f32 %v1290, 1.0
        %v1316 = vadd.f32 %v1291, 1.0
        %v1317 = vmul.f32 %v1315, %v1313
        %v1318 = vmul.f32 %v1316, %v1314
        %v1319 = vadd.f32 %v1317, %v1292
        %v1320 = vadd.f32 %v1318, %v1293
        %1321 = vst [vmem:[%s264] sm:$0xff] %v1319
        %1322 = vst [vmem:[%s264 + $0x8] sm:$0xff] %v1320
        %s1323 = sand.u32 %s125, 1
        %s1324 = scalar_lea.sflag [#allocation4], %s1323
        %s1325 = sand.u32 %s125, 1
        %s1326 = smul.addr %s1325, 16
        %s1327 = scalar_lea.vmem [#allocation8], %s1326
        // Predicated region
        $region45: #{csain_forward.1} parent=31 // pred_check
          %p1328 = pneg %p135
        $region46: #{csain_forward.1} parent=31 // pred_check_branch
          %1330 = sbr.rel (%p1328) target = $region48
        $region47: #{csain_forward.1} parent=31 // pred_region
          %s1332 = ssub.s32 256, 256
          %1333 = vsyncadd %s1324, %s1332
          %s1334 = smul.addr %s28, 2
          %s1335 = smul.addr %s27, 2
          %s1336 = sadd.s32 %s1334, %s1335
          %s1337 = smul.addr %s1336, 128
          %s1338 = scalar_lea.hbm %s3, %s1337
          %s1340 = sshll.u32 %s1327, 4
          %s1341 = int_to_ptr.vmem [resolvable:$true] %s1340
          %1343 = dma.vmem_to_hbm [thread:$0]  %s1341, 256, %s1338, %s1324
        $region48: #{csain_forward.1} parent=31 // pred_fallthru
          _
      $region32: #{csain_forward.1} parent=5 // pred_fallthru
        _
      %p1344 = scmp.le.s32.totalorder 2, %s18
      // Predicated region
      $region49: #{csain_forward.1} parent=5 // pred_check
        %p1345 = pneg %p1344
      $region50: #{csain_forward.1} parent=5 // pred_check_branch
        %1347 = sbr.rel (%p1345) target = $region52
      $region51: #{csain_forward.1} parent=5 // pred_region
        %s1348 = ssub.s32 %s18, 2
        // Predicated region
        $region53: #{csain_forward.1} parent=51 // pred_check
          %p1349 = pneg %p141
        $region54: #{csain_forward.1} parent=51 // pred_check_branch
          %1351 = sbr.rel (%p1349) target = $region56
        $region55: #{csain_forward.1} parent=51 // pred_region
          %s1352 = sand.u32 %s126, 1
          %s1353 = scalar_lea.sflag [#allocation4], %s1352
          %s1354 = sand.u32 %s126, 1
          %s1355 = smul.addr %s1354, 16
          %s1356 = scalar_lea.vmem [#allocation8], %s1355
          %1357 = dma.done %s1353, 256
        $region56: #{csain_forward.1} parent=51 // pred_fallthru
          _
      $region52: #{csain_forward.1} parent=5 // pred_fallthru
        _
    $region6: #{csain_forward.1} parent=1 // loop_footer
      %s22 = sadd.s32 1, %s18
    $region7: #{csain_forward.1} parent=1 // loop_footer_branch
      %17 = sbr.rel target = $region3
    $region8: #{csain_forward.1} parent=1 // loop_exit
      _
    %1358 = vsyncpa [#allocation3], 1
    %s1359 = scalar_lea.sflag [#allocation3], 1
    %1360 = vsyncpa %s1359, 1
    %1361 = vsyncpa [#allocation6], 1
    %s1362 = scalar_lea.sflag [#allocation6], 1
    %1363 = vsyncpa %s1362, 1
    %1364 = vsyncpa [#allocation4], 1
    %s1365 = scalar_lea.sflag [#allocation4], 1
    %1366 = vsyncpa %s1365, 1

</llo_original>
